<compile_context>
chip_gen: v6e
topology: v6e:2x2x1
jax: 0.10.0
libtpu: 0.0.40
codegen_flags: <defaults>
</compile_context>

<pallas_src>
import functools

import jax
import jax.numpy as jnp
from jax.experimental import pallas as pl
from jax.experimental.pallas import tpu as pltpu

STATE_DIM = 3
ACTION_DIM = 1
NET_WIDTH = 400      # l1 output features
HIDDEN2 = 300        # l2 output features

# Lane-aligned padded sizes (zero-padded; ReLU keeps padded lanes at 0).
H_PAD = 512          # both hidden dims padded to 512 -> one shared lane width
OUT_PAD = 128        # lane-dense output block; real action lives in lane 0

# Packed parameter slab layout: a single (P_ROWS, H_PAD) bf16 buffer.
#   rows [0, 512)  : W2  (400x300 zero-padded to 512x512)
#   rows 512..514  : W1 rows 0..2 (each padded 400 -> 512 lanes)
#   row  515       : b1 (padded)
#   row  516       : b2 (padded)
#   row  517       : W3[:, 0] as a row (padded 300 -> 512)
#   row  518       : b3 broadcast across lanes
#   rows 519..527  : zeros (pad rows to a multiple of the 16-row bf16 tile)
R_W2 = 0
R_W1 = 512
R_B1 = 515
R_B2 = 516
R_W3 = 517
R_B3 = 518
P_ROWS = 528

DEF_TB = 128         # batch rows per grid step


def actor_kernel(x_ref, p_ref, o_ref):
    f32 = jnp.float32
    x = x_ref[...].astype(f32)                              # (TB, 3)

    # ---- layer 1: K=3, so do it on the VPU (3 broadcast FMAs), not the MXU.
    w1_0 = p_ref[R_W1 + 0:R_W1 + 1, :].astype(f32)          # (1, 512)
    w1_1 = p_ref[R_W1 + 1:R_W1 + 2, :].astype(f32)
    w1_2 = p_ref[R_W1 + 2:R_W1 + 3, :].astype(f32)
    b1 = p_ref[R_B1:R_B1 + 1, :].astype(f32)
    h1 = x[:, 0:1] * w1_0 + x[:, 1:2] * w1_1 + x[:, 2:3] * w1_2 + b1
    h1 = jnp.maximum(h1, 0.0)                               # (TB, 512); pads stay 0

    # ---- layer 2: the only real matmul -> MXU, bf16 operands, f32 accumulate.
    w2 = p_ref[R_W2:R_W2 + H_PAD, :]                        # (512, 512) bf16
    b2 = p_ref[R_B2:R_B2 + 1, :].astype(f32)
    h2 = jnp.dot(h1.astype(p_ref.dtype), w2, preferred_element_type=f32)
    h2 = jnp.maximum(h2 + b2, 0.0)                          # (TB, 512); pads stay 0

    # ---- layer 3: N=1, so use an XLU lane-reduction instead of the MXU.
    w3 = p_ref[R_W3:R_W3 + 1, :].astype(f32)                # (1, 512)
    b3 = p_ref[R_B3:R_B3 + 1, 0:1].astype(f32)              # (1, 1)
    a = jnp.sum(h2 * w3, axis=-1, keepdims=True) + b3       # (TB, 1)
    a = jnp.tanh(a) * 2.0

    # Lane-dense store: broadcast the action across the 128-wide output block.
    o_ref[...] = jnp.broadcast_to(a, o_ref.shape).astype(o_ref.dtype)


@functools.partial(jax.jit, static_argnames=("block_b",))
def actor_forward(state, packed_params, *, block_b=DEF_TB):
    b = state.shape[0]
    nb = pl.cdiv(b, block_b)
    b_pad = nb * block_b
    if b_pad != b:
        state = jnp.pad(state, ((0, b_pad - b), (0, 0)))

    out = pl.pallas_call(
        actor_kernel,
        out_shape=jax.ShapeDtypeStruct((b_pad, OUT_PAD), jnp.float32),
        grid=(nb,),
        in_specs=[
            pl.BlockSpec((block_b, STATE_DIM), lambda i: (i, 0)),
            # Constant block index: packed weights are DMA'd once and stay
            # resident in VMEM across every batch tile.
            pl.BlockSpec((P_ROWS, H_PAD), lambda i: (0, 0)),
        ],
        out_specs=pl.BlockSpec((block_b, OUT_PAD), lambda i: (i, 0)),
        compiler_params=pltpu.CompilerParams(
            dimension_semantics=("parallel",),
        ),
    )(state, packed_params)
    return out[:b, :ACTION_DIM]


def init_params(key):
    """U(-1/sqrt(fan_in), +1/sqrt(fan_in)) like nn.Linear; weights stored (in, out)."""
    def linear(k, fan_in, fan_out):
        kw, kb = jax.random.split(k)
        bound = 1.0 / jnp.sqrt(float(fan_in))
        w = jax.random.uniform(kw, (fan_in, fan_out), jnp.float32, -bound, bound)
        b = jax.random.uniform(kb, (1, fan_out), jnp.float32, -bound, bound)
        return w, b

    k1, k2, k3 = jax.random.split(key, 3)
    w1, b1 = linear(k1, STATE_DIM, NET_WIDTH)
    w2, b2 = linear(k2, NET_WIDTH, HIDDEN2)
    w3, b3 = linear(k3, HIDDEN2, ACTION_DIM)
    return (w1, b1, w2, b2, w3, b3)


def pack_params(params, dtype=jnp.bfloat16):
    """Pack all six parameter tensors into one lane-aligned slab (single operand)."""
    w1, b1, w2, b2, w3, b3 = params
    p = jnp.zeros((P_ROWS, H_PAD), jnp.float32)
    p = p.at[R_W2:R_W2 + NET_WIDTH, :HIDDEN2].set(w2)
    p = p.at[R_W1:R_W1 + STATE_DIM, :NET_WIDTH].set(w1)
    p = p.at[R_B1, :NET_WIDTH].set(b1[0])
    p = p.at[R_B2, :HIDDEN2].set(b2[0])
    p = p.at[R_W3, :HIDDEN2].set(w3[:, 0])
    p = p.at[R_B3, :].set(b3[0, 0])
    return p.astype(dtype)


def _dot(a, b):
    return jnp.dot(a, b, precision=jax.lax.Precision.HIGHEST)


def actor_reference(state, params):
    """Pure f32 reference of the original PyTorch module."""
    w1, b1, w2, b2, w3, b3 = params
    a = jnp.maximum(_dot(state, w1) + b1, 0.0)
    a = jnp.maximum(_dot(a, w2) + b2, 0.0)
    return jnp.tanh(_dot(a, w3) + b3) * 2.0


def actor_reference_bf16(state, params):
    """Reference matching the kernel numerics (bf16 weights / l2 input, f32 accum)."""
    rw = lambda t: t.astype(jnp.bfloat16).astype(jnp.float32)
    w1, b1, w2, b2, w3, b3 = [rw(t) for t in params]
    h1 = jnp.maximum(_dot(state, w1) + b1, 0.0)
    h1 = rw(h1)
    h2 = jnp.maximum(_dot(h1, w2) + b2, 0.0)
    return jnp.tanh(_dot(h2, w3) + b3) * 2.0


if __name__ == "__main__":
    key = jax.random.PRNGKey(0)
    k_params, k_state = jax.random.split(key)

    params = init_params(k_params)
    packed = pack_params(params)

    # Small batch (like the original test) and a multi-tile batch that
    # exercises the grid with VMEM-resident weights.
    for batch in (8, 512):
        state = jax.random.normal(
            jax.random.fold_in(k_state, batch), (batch, STATE_DIM), jnp.float32)

        out = jax.block_until_ready(actor_forward(state, packed))
        assert out.shape == (batch, ACTION_DIM)

        ref_exact = actor_reference_bf16(state, params)   # same bf16 weights as kernel
        ref_f32 = actor_reference(state, params)          # original f32 module
        assert jnp.allclose(out, ref_exact, atol=1e-3, rtol=1e-3), "mismatch vs bf16 reference"
        assert jnp.allclose(out, ref_f32, atol=2e-2, rtol=2e-2), "mismatch vs f32 reference"

    print("KERNEL_OK")
</pallas_src>

<mosaic_0001>
module attributes {stable_mosaic.version = 11 : i64} {
  func.func @actor_kernel(%arg0: i32, %arg1: memref<128x3xf32, #tpu.memory_space<vmem>>, %arg2: memref<528x512xbf16, #tpu.memory_space<vmem>>, %arg3: memref<128x128xf32, #tpu.memory_space<vmem>>) attributes {dimension_semantics = [#tpu.dimension_semantics<parallel>], iteration_bounds = array<i64: 1>, scalar_prefetch = 0 : i64, scratch_operands = 0 : i64, tpu.core_type = #tpu.core_type<tc>, window_params = [{transform_indices = @transform_0, window_bounds = array<i64: 128, 3>}, {pipeline_mode = #tpu.pipeline_mode<synchronous>, transform_indices = @transform_1, window_bounds = array<i64: 528, 512>}, {transform_indices = @transform_2, window_bounds = array<i64: 128, 128>}]} {
    %c0 = arith.constant 0 : index
    %c0_0 = arith.constant 0 : index
    %0 = vector.load %arg1[%c0, %c0_0] : memref<128x3xf32, #tpu.memory_space<vmem>>, vector<128x3xf32>
    %c512 = arith.constant 512 : index
    %c0_1 = arith.constant 0 : index
    %1 = vector.load %arg2[%c512, %c0_1] : memref<528x512xbf16, #tpu.memory_space<vmem>>, vector<1x512xbf16>
    %2 = arith.extf %1 : vector<1x512xbf16> to vector<1x512xf32>
    %c513 = arith.constant 513 : index
    %c0_2 = arith.constant 0 : index
    %3 = vector.load %arg2[%c513, %c0_2] : memref<528x512xbf16, #tpu.memory_space<vmem>>, vector<1x512xbf16>
    %4 = arith.extf %3 : vector<1x512xbf16> to vector<1x512xf32>
    %c514 = arith.constant 514 : index
    %c0_3 = arith.constant 0 : index
    %5 = vector.load %arg2[%c514, %c0_3] : memref<528x512xbf16, #tpu.memory_space<vmem>>, vector<1x512xbf16>
    %6 = arith.extf %5 : vector<1x512xbf16> to vector<1x512xf32>
    %c515 = arith.constant 515 : index
    %c0_4 = arith.constant 0 : index
    %7 = vector.load %arg2[%c515, %c0_4] : memref<528x512xbf16, #tpu.memory_space<vmem>>, vector<1x512xbf16>
    %8 = arith.extf %7 : vector<1x512xbf16> to vector<1x512xf32>
    %9 = vector.extract_strided_slice %0 {offsets = [0, 0], sizes = [128, 1], strides = [1, 1]} : vector<128x3xf32> to vector<128x1xf32>
    %10 = vector.broadcast %9 : vector<128x1xf32> to vector<128x512xf32>
    %11 = vector.broadcast %2 : vector<1x512xf32> to vector<128x512xf32>
    %12 = arith.mulf %10, %11 : vector<128x512xf32>
    %13 = vector.extract_strided_slice %0 {offsets = [0, 1], sizes = [128, 1], strides = [1, 1]} : vector<128x3xf32> to vector<128x1xf32>
    %14 = vector.broadcast %13 : vector<128x1xf32> to vector<128x512xf32>
    %15 = vector.broadcast %4 : vector<1x512xf32> to vector<128x512xf32>
    %16 = arith.mulf %14, %15 : vector<128x512xf32>
    %17 = arith.addf %12, %16 : vector<128x512xf32>
    %18 = vector.extract_strided_slice %0 {offsets = [0, 2], sizes = [128, 1], strides = [1, 1]} : vector<128x3xf32> to vector<128x1xf32>
    %19 = vector.broadcast %18 : vector<128x1xf32> to vector<128x512xf32>
    %20 = vector.broadcast %6 : vector<1x512xf32> to vector<128x512xf32>
    %21 = arith.mulf %19, %20 : vector<128x512xf32>
    %22 = arith.addf %17, %21 : vector<128x512xf32>
    %23 = vector.broadcast %8 : vector<1x512xf32> to vector<128x512xf32>
    %24 = arith.addf %22, %23 : vector<128x512xf32>
    %cst = arith.constant 0.000000e+00 : f32
    %25 = vector.broadcast %cst : f32 to vector<128x512xf32>
    %26 = arith.maximumf %24, %25 : vector<128x512xf32>
    %c0_5 = arith.constant 0 : index
    %c0_6 = arith.constant 0 : index
    %27 = vector.load %arg2[%c0_5, %c0_6] : memref<528x512xbf16, #tpu.memory_space<vmem>>, vector<512x512xbf16>
    %c516 = arith.constant 516 : index
    %c0_7 = arith.constant 0 : index
    %28 = vector.load %arg2[%c516, %c0_7] : memref<528x512xbf16, #tpu.memory_space<vmem>>, vector<1x512xbf16>
    %29 = arith.extf %28 : vector<1x512xbf16> to vector<1x512xf32>
    %30 = arith.truncf %26 : vector<128x512xf32> to vector<128x512xbf16>
    %cst_8 = arith.constant dense<0.000000e+00> : vector<128x512xf32>
    %31 = tpu.matmul %30, %27, %cst_8 {dimension_numbers = #tpu.dot_dimension_numbers<[1], [0], [0], [1], [0, 0, 1, 1], [], []>} : vector<128x512xbf16>, vector<512x512xbf16>, vector<128x512xf32> -> vector<128x512xf32>
    %32 = vector.broadcast %29 : vector<1x512xf32> to vector<128x512xf32>
    %33 = arith.addf %31, %32 : vector<128x512xf32>
    %cst_9 = arith.constant 0.000000e+00 : f32
    %34 = vector.broadcast %cst_9 : f32 to vector<128x512xf32>
    %35 = arith.maximumf %33, %34 : vector<128x512xf32>
    %c517 = arith.constant 517 : index
    %c0_10 = arith.constant 0 : index
    %36 = vector.load %arg2[%c517, %c0_10] : memref<528x512xbf16, #tpu.memory_space<vmem>>, vector<1x512xbf16>
    %37 = arith.extf %36 : vector<1x512xbf16> to vector<1x512xf32>
    %c518 = arith.constant 518 : index
    %c0_11 = arith.constant 0 : index
    %38 = vector.load %arg2[%c518, %c0_11] : memref<528x512xbf16, #tpu.memory_space<vmem>>, vector<1x1xbf16>
    %39 = arith.extf %38 : vector<1x1xbf16> to vector<1x1xf32>
    %40 = vector.broadcast %37 : vector<1x512xf32> to vector<128x512xf32>
    %41 = arith.mulf %35, %40 : vector<128x512xf32>
    %cst_12 = arith.constant dense<0.000000e+00> : vector<128xf32>
    %42 = vector.multi_reduction <add>, %41, %cst_12 [1] : vector<128x512xf32> to vector<128xf32>
    %43 = vector.shape_cast %42 : vector<128xf32> to vector<128x1xf32>
    %44 = vector.broadcast %39 : vector<1x1xf32> to vector<128x1xf32>
    %45 = arith.addf %43, %44 : vector<128x1xf32>
    %46 = math.tanh %45 : vector<128x1xf32>
    %cst_13 = arith.constant 2.000000e+00 : f32
    %47 = vector.broadcast %cst_13 : f32 to vector<128x1xf32>
    %48 = arith.mulf %46, %47 : vector<128x1xf32>
    %49 = vector.shape_cast %48 : vector<128x1xf32> to vector<128x1xf32>
    %50 = vector.broadcast %49 : vector<128x1xf32> to vector<128x128xf32>
    %c0_14 = arith.constant 0 : index
    %c0_15 = arith.constant 0 : index
    %51 = vector.load %arg3[%c0_14, %c0_15] : memref<128x128xf32, #tpu.memory_space<vmem>>, vector<128x128xf32>
    tpu.vector_store %arg3[%c0_14, %c0_15], %50 {strides = array<i32>} : memref<128x128xf32, #tpu.memory_space<vmem>>, vector<128x128xf32>,
    return
  }
  func.func @transform_0(%arg0: i32) -> (i32, i32) {
    %c0_i32 = arith.constant 0 : i32
    %c0_i32_0 = arith.constant 0 : i32
    return %arg0, %c0_i32 : i32, i32
  }
  func.func @transform_1(%arg0: i32) -> (i32, i32) {
    %c0_i32 = arith.constant 0 : i32
    %c0_i32_0 = arith.constant 0 : i32
    %c0_i32_1 = arith.constant 0 : i32
    return %c0_i32, %c0_i32_0 : i32, i32
  }
  func.func @transform_2(%arg0: i32) -> (i32, i32) {
    %c0_i32 = arith.constant 0 : i32
    %c0_i32_0 = arith.constant 0 : i32
    return %arg0, %c0_i32 : i32, i32
  }
}

</mosaic_0001>

<llo_original>
// kernel: actor_forward.1
$region0: #{actor_forward.1}
  #allocation0 [shape = 'u32[]', space=smem, size = 0x4, offset = 0x4, fixed_abs, tag = 'smem constant byte address 0x4 - core index']
  #allocation1 [shape = 'u32[144,128]{1,0:T(1,128)}', space=vmem, size = 0x12000, scoped, tag = 'internal scratch']
  %s0 = inlined_call_operand.vmem [shape: f32[128,3], index: 0, kind: input, shape index: {}]
  %s1 = inlined_call_operand.hbm [shape: bf16[528,512], index: 1, kind: input, shape index: {}]
  %s2 = inlined_call_operand.vmem [shape: f32[128,128], index: 2, kind: output, shape index: {}]
  %s3 = sld [smem:[#allocation0]]
  $region22: #{actor_forward.1} parent=0
    _
  %s5 = ssub.s32 1, %s3
  %s6 = scalar_select 0, %s5, %s3
  $region1: #{actor_forward.1} parent=0
    #allocation2 [shape = 'u8[540672]{0}', space=vmem, size = 0x84000, scoped, tag = 'input window, operand 1, single buffered']
    #allocation3 [shape = 's32[1]{0}', space=sflag, size = 0x4, scoped, tag = 'scoped memory for actor_forward.1']
    %7 = vsyncpa [#allocation3], 0
    // Predicated region
    $region2: #{actor_forward.1} parent=1 // pred_check
      _
    $region3: #{actor_forward.1} parent=1 // pred_check_branch
      %9 = sbr.rel (0) target = $region5
    $region4: #{actor_forward.1} parent=1 // pred_region
      _
    $region5: #{actor_forward.1} parent=1 // pred_fallthru
      _
    // Predicated region
    $region6: #{actor_forward.1} parent=1 // pred_check
      _
    $region7: #{actor_forward.1} parent=1 // pred_check_branch
      %11 = sbr.rel (0) target = $region9
    $region8: #{actor_forward.1} parent=1 // pred_region
      %s13 = ssub.s32 16896, 16896
      %14 = vsyncadd [#allocation3], %s13
      %s15 = sshll.u32 [#allocation2], 4
      %s16 = int_to_ptr.vmem [resolvable:$true] %s15
      %21 = dma.hbm_to_vmem [thread:$0]  %s1, 16896, %s16, [#allocation3], 256, 256, 16
    $region9: #{actor_forward.1} parent=1 // pred_fallthru
      _
    // Predicated region
    $region10: #{actor_forward.1} parent=1 // pred_check
      _
    $region11: #{actor_forward.1} parent=1 // pred_check_branch
      %23 = sbr.rel (0) target = $region13
    $region12: #{actor_forward.1} parent=1 // pred_region
      %24 = dma.done [#allocation3], 16896
    $region13: #{actor_forward.1} parent=1 // pred_fallthru
      _
    %v25 = vld [vmem:[%s0] sm:$0xff]
    %v26 = vld [vmem:[%s0 + $0x8] sm:$0xff]
    %v27 = vld [vmem:[%s0 + $0x10] sm:$0xff]
    %v28 = vld [vmem:[%s0 + $0x18] sm:$0xff]
    %v29 = vld [vmem:[%s0 + $0x20] sm:$0xff]
    %v30 = vld [vmem:[%s0 + $0x28] sm:$0xff]
    %v31 = vld [vmem:[%s0 + $0x30] sm:$0xff]
    %v32 = vld [vmem:[%s0 + $0x38] sm:$0xff]
    %v33 = vld [vmem:[%s0 + $0x40] sm:$0xff]
    %v34 = vld [vmem:[%s0 + $0x48] sm:$0xff]
    %v35 = vld [vmem:[%s0 + $0x50] sm:$0xff]
    %v36 = vld [vmem:[%s0 + $0x58] sm:$0xff]
    %v37 = vld [vmem:[%s0 + $0x60] sm:$0xff]
    %v38 = vld [vmem:[%s0 + $0x68] sm:$0xff]
    %v39 = vld [vmem:[%s0 + $0x70] sm:$0xff]
    %v40 = vld [vmem:[%s0 + $0x78] sm:$0xff]
    %v41 = vld [vmem:[#allocation2 + $0x400] sm:$0x11]
    %v42 = vld [vmem:[#allocation2 + $0x408] sm:$0x11]
    %v43 = vunpack.c.l.bf16 %v41
    %v44 = vunpack.c.h.bf16 %v41
    %v45 = vunpack.c.l.bf16 %v42
    %v46 = vunpack.c.h.bf16 %v42
    %v47 = vld [vmem:[#allocation2 + $0x400] sm:$0x22]
    %v48 = vld [vmem:[#allocation2 + $0x408] sm:$0x22]
    %v49 = vunpack.c.l.bf16 %v47
    %v50 = vunpack.c.h.bf16 %v47
    %v51 = vunpack.c.l.bf16 %v48
    %v52 = vunpack.c.h.bf16 %v48
    %54 = vset.pattern.permute.xlu0 0
    %55 = vperm.xlu0 %54, %v25
    %v56 = vpop.permute.xlu0 %55
    %59 = vset.pattern.permute.xlu0 0
    %60 = vperm.xlu0 %59, %v26
    %v61 = vpop.permute.xlu0 %60
    %64 = vset.pattern.permute.xlu0 0
    %65 = vperm.xlu0 %64, %v27
    %v66 = vpop.permute.xlu0 %65
    %69 = vset.pattern.permute.xlu0 0
    %70 = vperm.xlu0 %69, %v28
    %v71 = vpop.permute.xlu0 %70
    %74 = vset.pattern.permute.xlu0 0
    %75 = vperm.xlu0 %74, %v29
    %v76 = vpop.permute.xlu0 %75
    %79 = vset.pattern.permute.xlu0 0
    %80 = vperm.xlu0 %79, %v30
    %v81 = vpop.permute.xlu0 %80
    %84 = vset.pattern.permute.xlu0 0
    %85 = vperm.xlu0 %84, %v31
    %v86 = vpop.permute.xlu0 %85
    %89 = vset.pattern.permute.xlu0 0
    %90 = vperm.xlu0 %89, %v32
    %v91 = vpop.permute.xlu0 %90
    %94 = vset.pattern.permute.xlu0 0
    %95 = vperm.xlu0 %94, %v33
    %v96 = vpop.permute.xlu0 %95
    %99 = vset.pattern.permute.xlu0 0
    %100 = vperm.xlu0 %99, %v34
    %v101 = vpop.permute.xlu0 %100
    %104 = vset.pattern.permute.xlu0 0
    %105 = vperm.xlu0 %104, %v35
    %v106 = vpop.permute.xlu0 %105
    %109 = vset.pattern.permute.xlu0 0
    %110 = vperm.xlu0 %109, %v36
    %v111 = vpop.permute.xlu0 %110
    %114 = vset.pattern.permute.xlu0 0
    %115 = vperm.xlu0 %114, %v37
    %v116 = vpop.permute.xlu0 %115
    %119 = vset.pattern.permute.xlu0 0
    %120 = vperm.xlu0 %119, %v38
    %v121 = vpop.permute.xlu0 %120
    %124 = vset.pattern.permute.xlu0 0
    %125 = vperm.xlu0 %124, %v39
    %v126 = vpop.permute.xlu0 %125
    %129 = vset.pattern.permute.xlu0 0
    %130 = vperm.xlu0 %129, %v40
    %v131 = vpop.permute.xlu0 %130
    %v133 = vlaneseq
    %v134 = vshrl.u32 %v133, 7
    %v135 = vsub.s32 0, %v134
    %v136 = vrot.slane %v43, %v135
    %v137 = vlaneseq
    %v138 = vshrl.u32 %v137, 7
    %v139 = vsub.s32 0, %v138
    %v140 = vrot.slane %v44, %v139
    %v141 = vlaneseq
    %v142 = vshrl.u32 %v141, 7
    %v143 = vsub.s32 0, %v142
    %v144 = vrot.slane %v45, %v143
    %v145 = vlaneseq
    %v146 = vshrl.u32 %v145, 7
    %v147 = vsub.s32 0, %v146
    %v148 = vrot.slane %v46, %v147
    %v149 = vmul.f32 %v56, %v136
    %v150 = vmul.f32 %v56, %v140
    %v151 = vmul.f32 %v56, %v144
    %v152 = vmul.f32 %v56, %v148
    %v153 = vmul.f32 %v61, %v136
    %v154 = vmul.f32 %v61, %v140
    %v155 = vmul.f32 %v61, %v144
    %v156 = vmul.f32 %v61, %v148
    %v157 = vmul.f32 %v66, %v136
    %v158 = vmul.f32 %v66, %v140
    %v159 = vmul.f32 %v66, %v144
    %v160 = vmul.f32 %v66, %v148
    %v161 = vmul.f32 %v71, %v136
    %v162 = vmul.f32 %v71, %v140
    %v163 = vmul.f32 %v71, %v144
    %v164 = vmul.f32 %v71, %v148
    %v165 = vmul.f32 %v76, %v136
    %v166 = vmul.f32 %v76, %v140
    %v167 = vmul.f32 %v76, %v144
    %v168 = vmul.f32 %v76, %v148
    %v169 = vmul.f32 %v81, %v136
    %v170 = vmul.f32 %v81, %v140
    %v171 = vmul.f32 %v81, %v144
    %v172 = vmul.f32 %v81, %v148
    %v173 = vmul.f32 %v86, %v136
    %v174 = vmul.f32 %v86, %v140
    %v175 = vmul.f32 %v86, %v144
    %v176 = vmul.f32 %v86, %v148
    %v177 = vmul.f32 %v91, %v136
    %v178 = vmul.f32 %v91, %v140
    %v179 = vmul.f32 %v91, %v144
    %v180 = vmul.f32 %v91, %v148
    %v181 = vmul.f32 %v96, %v136
    %v182 = vmul.f32 %v96, %v140
    %v183 = vmul.f32 %v96, %v144
    %v184 = vmul.f32 %v96, %v148
    %v185 = vmul.f32 %v101, %v136
    %v186 = vmul.f32 %v101, %v140
    %v187 = vmul.f32 %v101, %v144
    %v188 = vmul.f32 %v101, %v148
    %v189 = vmul.f32 %v106, %v136
    %v190 = vmul.f32 %v106, %v140
    %v191 = vmul.f32 %v106, %v144
    %v192 = vmul.f32 %v106, %v148
    %v193 = vmul.f32 %v111, %v136
    %v194 = vmul.f32 %v111, %v140
    %v195 = vmul.f32 %v111, %v144
    %v196 = vmul.f32 %v111, %v148
    %v197 = vmul.f32 %v116, %v136
    %v198 = vmul.f32 %v116, %v140
    %v199 = vmul.f32 %v116, %v144
    %v200 = vmul.f32 %v116, %v148
    %v201 = vmul.f32 %v121, %v136
    %v202 = vmul.f32 %v121, %v140
    %v203 = vmul.f32 %v121, %v144
    %v204 = vmul.f32 %v121, %v148
    %v205 = vmul.f32 %v126, %v136
    %v206 = vmul.f32 %v126, %v140
    %v207 = vmul.f32 %v126, %v144
    %v208 = vmul.f32 %v126, %v148
    %v209 = vmul.f32 %v131, %v136
    %v210 = vmul.f32 %v131, %v140
    %v211 = vmul.f32 %v131, %v144
    %v212 = vmul.f32 %v131, %v148
    %213 = vset.pattern.permute.xlu0 1
    %214 = vperm.xlu0 %213, %v25
    %v215 = vpop.permute.xlu0 %214
    %217 = vset.pattern.permute.xlu0 1
    %218 = vperm.xlu0 %217, %v26
    %v219 = vpop.permute.xlu0 %218
    %221 = vset.pattern.permute.xlu0 1
    %222 = vperm.xlu0 %221, %v27
    %v223 = vpop.permute.xlu0 %222
    %225 = vset.pattern.permute.xlu0 1
    %226 = vperm.xlu0 %225, %v28
    %v227 = vpop.permute.xlu0 %226
    %229 = vset.pattern.permute.xlu0 1
    %230 = vperm.xlu0 %229, %v29
    %v231 = vpop.permute.xlu0 %230
    %233 = vset.pattern.permute.xlu0 1
    %234 = vperm.xlu0 %233, %v30
    %v235 = vpop.permute.xlu0 %234
    %237 = vset.pattern.permute.xlu0 1
    %238 = vperm.xlu0 %237, %v31
    %v239 = vpop.permute.xlu0 %238
    %241 = vset.pattern.permute.xlu0 1
    %242 = vperm.xlu0 %241, %v32
    %v243 = vpop.permute.xlu0 %242
    %245 = vset.pattern.permute.xlu0 1
    %246 = vperm.xlu0 %245, %v33
    %v247 = vpop.permute.xlu0 %246
    %249 = vset.pattern.permute.xlu0 1
    %250 = vperm.xlu0 %249, %v34
    %v251 = vpop.permute.xlu0 %250
    %253 = vset.pattern.permute.xlu0 1
    %254 = vperm.xlu0 %253, %v35
    %v255 = vpop.permute.xlu0 %254
    %257 = vset.pattern.permute.xlu0 1
    %258 = vperm.xlu0 %257, %v36
    %v259 = vpop.permute.xlu0 %258
    %261 = vset.pattern.permute.xlu0 1
    %262 = vperm.xlu0 %261, %v37
    %v263 = vpop.permute.xlu0 %262
    %265 = vset.pattern.permute.xlu0 1
    %266 = vperm.xlu0 %265, %v38
    %v267 = vpop.permute.xlu0 %266
    %269 = vset.pattern.permute.xlu0 1
    %270 = vperm.xlu0 %269, %v39
    %v271 = vpop.permute.xlu0 %270
    %273 = vset.pattern.permute.xlu0 1
    %274 = vperm.xlu0 %273, %v40
    %v275 = vpop.permute.xlu0 %274
    %v277 = vlaneseq
    %v278 = vshrl.u32 %v277, 7
    %v279 = vsub.s32 1, %v278
    %v280 = vrot.slane %v43, %v279
    %v281 = vlaneseq
    %v282 = vshrl.u32 %v281, 7
    %v283 = vsub.s32 1, %v282
    %v284 = vrot.slane %v44, %v283
    %v285 = vlaneseq
    %v286 = vshrl.u32 %v285, 7
    %v287 = vsub.s32 1, %v286
    %v288 = vrot.slane %v45, %v287
    %v289 = vlaneseq
    %v290 = vshrl.u32 %v289, 7
    %v291 = vsub.s32 1, %v290
    %v292 = vrot.slane %v46, %v291
    %v293 = vmul.f32 %v215, %v280
    %v294 = vmul.f32 %v215, %v284
    %v295 = vmul.f32 %v215, %v288
    %v296 = vmul.f32 %v215, %v292
    %v297 = vmul.f32 %v219, %v280
    %v298 = vmul.f32 %v219, %v284
    %v299 = vmul.f32 %v219, %v288
    %v300 = vmul.f32 %v219, %v292
    %v301 = vmul.f32 %v223, %v280
    %v302 = vmul.f32 %v223, %v284
    %v303 = vmul.f32 %v223, %v288
    %v304 = vmul.f32 %v223, %v292
    %v305 = vmul.f32 %v227, %v280
    %v306 = vmul.f32 %v227, %v284
    %v307 = vmul.f32 %v227, %v288
    %v308 = vmul.f32 %v227, %v292
    %v309 = vmul.f32 %v231, %v280
    %v310 = vmul.f32 %v231, %v284
    %v311 = vmul.f32 %v231, %v288
    %v312 = vmul.f32 %v231, %v292
    %v313 = vmul.f32 %v235, %v280
    %v314 = vmul.f32 %v235, %v284
    %v315 = vmul.f32 %v235, %v288
    %v316 = vmul.f32 %v235, %v292
    %v317 = vmul.f32 %v239, %v280
    %v318 = vmul.f32 %v239, %v284
    %v319 = vmul.f32 %v239, %v288
    %v320 = vmul.f32 %v239, %v292
    %v321 = vmul.f32 %v243, %v280
    %v322 = vmul.f32 %v243, %v284
    %v323 = vmul.f32 %v243, %v288
    %v324 = vmul.f32 %v243, %v292
    %v325 = vmul.f32 %v247, %v280
    %v326 = vmul.f32 %v247, %v284
    %v327 = vmul.f32 %v247, %v288
    %v328 = vmul.f32 %v247, %v292
    %v329 = vmul.f32 %v251, %v280
    %v330 = vmul.f32 %v251, %v284
    %v331 = vmul.f32 %v251, %v288
    %v332 = vmul.f32 %v251, %v292
    %v333 = vmul.f32 %v255, %v280
    %v334 = vmul.f32 %v255, %v284
    %v335 = vmul.f32 %v255, %v288
    %v336 = vmul.f32 %v255, %v292
    %v337 = vmul.f32 %v259, %v280
    %v338 = vmul.f32 %v259, %v284
    %v339 = vmul.f32 %v259, %v288
    %v340 = vmul.f32 %v259, %v292
    %v341 = vmul.f32 %v263, %v280
    %v342 = vmul.f32 %v263, %v284
    %v343 = vmul.f32 %v263, %v288
    %v344 = vmul.f32 %v263, %v292
    %v345 = vmul.f32 %v267, %v280
    %v346 = vmul.f32 %v267, %v284
    %v347 = vmul.f32 %v267, %v288
    %v348 = vmul.f32 %v267, %v292
    %v349 = vmul.f32 %v271, %v280
    %v350 = vmul.f32 %v271, %v284
    %v351 = vmul.f32 %v271, %v288
    %v352 = vmul.f32 %v271, %v292
    %v353 = vmul.f32 %v275, %v280
    %v354 = vmul.f32 %v275, %v284
    %v355 = vmul.f32 %v275, %v288
    %v356 = vmul.f32 %v275, %v292
    %v357 = vadd.f32 %v149, %v293
    %v358 = vadd.f32 %v150, %v294
    %v359 = vadd.f32 %v151, %v295
    %v360 = vadd.f32 %v152, %v296
    %v361 = vadd.f32 %v153, %v297
    %v362 = vadd.f32 %v154, %v298
    %v363 = vadd.f32 %v155, %v299
    %v364 = vadd.f32 %v156, %v300
    %v365 = vadd.f32 %v157, %v301
    %v366 = vadd.f32 %v158, %v302
    %v367 = vadd.f32 %v159, %v303
    %v368 = vadd.f32 %v160, %v304
    %v369 = vadd.f32 %v161, %v305
    %v370 = vadd.f32 %v162, %v306
    %v371 = vadd.f32 %v163, %v307
    %v372 = vadd.f32 %v164, %v308
    %v373 = vadd.f32 %v165, %v309
    %v374 = vadd.f32 %v166, %v310
    %v375 = vadd.f32 %v167, %v311
    %v376 = vadd.f32 %v168, %v312
    %v377 = vadd.f32 %v169, %v313
    %v378 = vadd.f32 %v170, %v314
    %v379 = vadd.f32 %v171, %v315
    %v380 = vadd.f32 %v172, %v316
    %v381 = vadd.f32 %v173, %v317
    %v382 = vadd.f32 %v174, %v318
    %v383 = vadd.f32 %v175, %v319
    %v384 = vadd.f32 %v176, %v320
    %v385 = vadd.f32 %v177, %v321
    %v386 = vadd.f32 %v178, %v322
    %v387 = vadd.f32 %v179, %v323
    %v388 = vadd.f32 %v180, %v324
    %v389 = vadd.f32 %v181, %v325
    %v390 = vadd.f32 %v182, %v326
    %v391 = vadd.f32 %v183, %v327
    %v392 = vadd.f32 %v184, %v328
    %v393 = vadd.f32 %v185, %v329
    %v394 = vadd.f32 %v186, %v330
    %v395 = vadd.f32 %v187, %v331
    %v396 = vadd.f32 %v188, %v332
    %v397 = vadd.f32 %v189, %v333
    %v398 = vadd.f32 %v190, %v334
    %v399 = vadd.f32 %v191, %v335
    %v400 = vadd.f32 %v192, %v336
    %v401 = vadd.f32 %v193, %v337
    %v402 = vadd.f32 %v194, %v338
    %v403 = vadd.f32 %v195, %v339
    %v404 = vadd.f32 %v196, %v340
    %v405 = vadd.f32 %v197, %v341
    %v406 = vadd.f32 %v198, %v342
    %v407 = vadd.f32 %v199, %v343
    %v408 = vadd.f32 %v200, %v344
    %v409 = vadd.f32 %v201, %v345
    %v410 = vadd.f32 %v202, %v346
    %v411 = vadd.f32 %v203, %v347
    %v412 = vadd.f32 %v204, %v348
    %v413 = vadd.f32 %v205, %v349
    %v414 = vadd.f32 %v206, %v350
    %v415 = vadd.f32 %v207, %v351
    %v416 = vadd.f32 %v208, %v352
    %v417 = vadd.f32 %v209, %v353
    %v418 = vadd.f32 %v210, %v354
    %v419 = vadd.f32 %v211, %v355
    %v420 = vadd.f32 %v212, %v356
    %421 = vset.pattern.permute.xlu0 2
    %422 = vperm.xlu0 %421, %v25
    %v423 = vpop.permute.xlu0 %422
    %425 = vset.pattern.permute.xlu0 2
    %426 = vperm.xlu0 %425, %v26
    %v427 = vpop.permute.xlu0 %426
    %429 = vset.pattern.permute.xlu0 2
    %430 = vperm.xlu0 %429, %v27
    %v431 = vpop.permute.xlu0 %430
    %433 = vset.pattern.permute.xlu0 2
    %434 = vperm.xlu0 %433, %v28
    %v435 = vpop.permute.xlu0 %434
    %437 = vset.pattern.permute.xlu0 2
    %438 = vperm.xlu0 %437, %v29
    %v439 = vpop.permute.xlu0 %438
    %441 = vset.pattern.permute.xlu0 2
    %442 = vperm.xlu0 %441, %v30
    %v443 = vpop.permute.xlu0 %442
    %445 = vset.pattern.permute.xlu0 2
    %446 = vperm.xlu0 %445, %v31
    %v447 = vpop.permute.xlu0 %446
    %449 = vset.pattern.permute.xlu0 2
    %450 = vperm.xlu0 %449, %v32
    %v451 = vpop.permute.xlu0 %450
    %453 = vset.pattern.permute.xlu0 2
    %454 = vperm.xlu0 %453, %v33
    %v455 = vpop.permute.xlu0 %454
    %457 = vset.pattern.permute.xlu0 2
    %458 = vperm.xlu0 %457, %v34
    %v459 = vpop.permute.xlu0 %458
    %461 = vset.pattern.permute.xlu0 2
    %462 = vperm.xlu0 %461, %v35
    %v463 = vpop.permute.xlu0 %462
    %465 = vset.pattern.permute.xlu0 2
    %466 = vperm.xlu0 %465, %v36
    %v467 = vpop.permute.xlu0 %466
    %469 = vset.pattern.permute.xlu0 2
    %470 = vperm.xlu0 %469, %v37
    %v471 = vpop.permute.xlu0 %470
    %473 = vset.pattern.permute.xlu0 2
    %474 = vperm.xlu0 %473, %v38
    %v475 = vpop.permute.xlu0 %474
    %477 = vset.pattern.permute.xlu0 2
    %478 = vperm.xlu0 %477, %v39
    %v479 = vpop.permute.xlu0 %478
    %481 = vset.pattern.permute.xlu0 2
    %482 = vperm.xlu0 %481, %v40
    %v483 = vpop.permute.xlu0 %482
    %v485 = vlaneseq
    %v486 = vshrl.u32 %v485, 7
    %v487 = vsub.s32 2, %v486
    %v488 = vrot.slane %v49, %v487
    %v489 = vlaneseq
    %v490 = vshrl.u32 %v489, 7
    %v491 = vsub.s32 2, %v490
    %v492 = vrot.slane %v50, %v491
    %v493 = vlaneseq
    %v494 = vshrl.u32 %v493, 7
    %v495 = vsub.s32 2, %v494
    %v496 = vrot.slane %v51, %v495
    %v497 = vlaneseq
    %v498 = vshrl.u32 %v497, 7
    %v499 = vsub.s32 2, %v498
    %v500 = vrot.slane %v52, %v499
    %v501 = vmul.f32 %v423, %v488
    %v502 = vmul.f32 %v423, %v492
    %v503 = vmul.f32 %v423, %v496
    %v504 = vmul.f32 %v423, %v500
    %v505 = vmul.f32 %v427, %v488
    %v506 = vmul.f32 %v427, %v492
    %v507 = vmul.f32 %v427, %v496
    %v508 = vmul.f32 %v427, %v500
    %v509 = vmul.f32 %v431, %v488
    %v510 = vmul.f32 %v431, %v492
    %v511 = vmul.f32 %v431, %v496
    %v512 = vmul.f32 %v431, %v500
    %v513 = vmul.f32 %v435, %v488
    %v514 = vmul.f32 %v435, %v492
    %v515 = vmul.f32 %v435, %v496
    %v516 = vmul.f32 %v435, %v500
    %v517 = vmul.f32 %v439, %v488
    %v518 = vmul.f32 %v439, %v492
    %v519 = vmul.f32 %v439, %v496
    %v520 = vmul.f32 %v439, %v500
    %v521 = vmul.f32 %v443, %v488
    %v522 = vmul.f32 %v443, %v492
    %v523 = vmul.f32 %v443, %v496
    %v524 = vmul.f32 %v443, %v500
    %v525 = vmul.f32 %v447, %v488
    %v526 = vmul.f32 %v447, %v492
    %v527 = vmul.f32 %v447, %v496
    %v528 = vmul.f32 %v447, %v500
    %v529 = vmul.f32 %v451, %v488
    %v530 = vmul.f32 %v451, %v492
    %v531 = vmul.f32 %v451, %v496
    %v532 = vmul.f32 %v451, %v500
    %v533 = vmul.f32 %v455, %v488
    %v534 = vmul.f32 %v455, %v492
    %v535 = vmul.f32 %v455, %v496
    %v536 = vmul.f32 %v455, %v500
    %v537 = vmul.f32 %v459, %v488
    %v538 = vmul.f32 %v459, %v492
    %v539 = vmul.f32 %v459, %v496
    %v540 = vmul.f32 %v459, %v500
    %v541 = vmul.f32 %v463, %v488
    %v542 = vmul.f32 %v463, %v492
    %v543 = vmul.f32 %v463, %v496
    %v544 = vmul.f32 %v463, %v500
    %v545 = vmul.f32 %v467, %v488
    %v546 = vmul.f32 %v467, %v492
    %v547 = vmul.f32 %v467, %v496
    %v548 = vmul.f32 %v467, %v500
    %v549 = vmul.f32 %v471, %v488
    %v550 = vmul.f32 %v471, %v492
    %v551 = vmul.f32 %v471, %v496
    %v552 = vmul.f32 %v471, %v500
    %v553 = vmul.f32 %v475, %v488
    %v554 = vmul.f32 %v475, %v492
    %v555 = vmul.f32 %v475, %v496
    %v556 = vmul.f32 %v475, %v500
    %v557 = vmul.f32 %v479, %v488
    %v558 = vmul.f32 %v479, %v492
    %v559 = vmul.f32 %v479, %v496
    %v560 = vmul.f32 %v479, %v500
    %v561 = vmul.f32 %v483, %v488
    %v562 = vmul.f32 %v483, %v492
    %v563 = vmul.f32 %v483, %v496
    %v564 = vmul.f32 %v483, %v500
    %v565 = vadd.f32 %v357, %v501
    %v566 = vadd.f32 %v358, %v502
    %v567 = vadd.f32 %v359, %v503
    %v568 = vadd.f32 %v360, %v504
    %v569 = vadd.f32 %v361, %v505
    %v570 = vadd.f32 %v362, %v506
    %v571 = vadd.f32 %v363, %v507
    %v572 = vadd.f32 %v364, %v508
    %v573 = vadd.f32 %v365, %v509
    %v574 = vadd.f32 %v366, %v510
    %v575 = vadd.f32 %v367, %v511
    %v576 = vadd.f32 %v368, %v512
    %v577 = vadd.f32 %v369, %v513
    %v578 = vadd.f32 %v370, %v514
    %v579 = vadd.f32 %v371, %v515
    %v580 = vadd.f32 %v372, %v516
    %v581 = vadd.f32 %v373, %v517
    %v582 = vadd.f32 %v374, %v518
    %v583 = vadd.f32 %v375, %v519
    %v584 = vadd.f32 %v376, %v520
    %v585 = vadd.f32 %v377, %v521
    %v586 = vadd.f32 %v378, %v522
    %v587 = vadd.f32 %v379, %v523
    %v588 = vadd.f32 %v380, %v524
    %v589 = vadd.f32 %v381, %v525
    %v590 = vadd.f32 %v382, %v526
    %v591 = vadd.f32 %v383, %v527
    %v592 = vadd.f32 %v384, %v528
    %v593 = vadd.f32 %v385, %v529
    %v594 = vadd.f32 %v386, %v530
    %v595 = vadd.f32 %v387, %v531
    %v596 = vadd.f32 %v388, %v532
    %v597 = vadd.f32 %v389, %v533
    %v598 = vadd.f32 %v390, %v534
    %v599 = vadd.f32 %v391, %v535
    %v600 = vadd.f32 %v392, %v536
    %v601 = vadd.f32 %v393, %v537
    %v602 = vadd.f32 %v394, %v538
    %v603 = vadd.f32 %v395, %v539
    %v604 = vadd.f32 %v396, %v540
    %v605 = vadd.f32 %v397, %v541
    %v606 = vadd.f32 %v398, %v542
    %v607 = vadd.f32 %v399, %v543
    %v608 = vadd.f32 %v400, %v544
    %v609 = vadd.f32 %v401, %v545
    %v610 = vadd.f32 %v402, %v546
    %v611 = vadd.f32 %v403, %v547
    %v612 = vadd.f32 %v404, %v548
    %v613 = vadd.f32 %v405, %v549
    %v614 = vadd.f32 %v406, %v550
    %v615 = vadd.f32 %v407, %v551
    %v616 = vadd.f32 %v408, %v552
    %v617 = vadd.f32 %v409, %v553
    %v618 = vadd.f32 %v410, %v554
    %v619 = vadd.f32 %v411, %v555
    %v620 = vadd.f32 %v412, %v556
    %v621 = vadd.f32 %v413, %v557
    %v622 = vadd.f32 %v414, %v558
    %v623 = vadd.f32 %v415, %v559
    %v624 = vadd.f32 %v416, %v560
    %v625 = vadd.f32 %v417, %v561
    %v626 = vadd.f32 %v418, %v562
    %v627 = vadd.f32 %v419, %v563
    %v628 = vadd.f32 %v420, %v564
    %v629 = vlaneseq
    %v630 = vshrl.u32 %v629, 7
    %v631 = vsub.s32 3, %v630
    %v632 = vrot.slane %v49, %v631
    %v633 = vlaneseq
    %v634 = vshrl.u32 %v633, 7
    %v635 = vsub.s32 3, %v634
    %v636 = vrot.slane %v50, %v635
    %v637 = vlaneseq
    %v638 = vshrl.u32 %v637, 7
    %v639 = vsub.s32 3, %v638
    %v640 = vrot.slane %v51, %v639
    %v641 = vlaneseq
    %v642 = vshrl.u32 %v641, 7
    %v643 = vsub.s32 3, %v642
    %v644 = vrot.slane %v52, %v643
    %v645 = vadd.f32 %v565, %v632
    %v646 = vadd.f32 %v566, %v636
    %v647 = vadd.f32 %v567, %v640
    %v648 = vadd.f32 %v568, %v644
    %v649 = vadd.f32 %v569, %v632
    %v650 = vadd.f32 %v570, %v636
    %v651 = vadd.f32 %v571, %v640
    %v652 = vadd.f32 %v572, %v644
    %v653 = vadd.f32 %v573, %v632
    %v654 = vadd.f32 %v574, %v636
    %v655 = vadd.f32 %v575, %v640
    %v656 = vadd.f32 %v576, %v644
    %v657 = vadd.f32 %v577, %v632
    %v658 = vadd.f32 %v578, %v636
    %v659 = vadd.f32 %v579, %v640
    %v660 = vadd.f32 %v580, %v644
    %v661 = vadd.f32 %v581, %v632
    %v662 = vadd.f32 %v582, %v636
    %v663 = vadd.f32 %v583, %v640
    %v664 = vadd.f32 %v584, %v644
    %v665 = vadd.f32 %v585, %v632
    %v666 = vadd.f32 %v586, %v636
    %v667 = vadd.f32 %v587, %v640
    %v668 = vadd.f32 %v588, %v644
    %v669 = vadd.f32 %v589, %v632
    %v670 = vadd.f32 %v590, %v636
    %v671 = vadd.f32 %v591, %v640
    %v672 = vadd.f32 %v592, %v644
    %v673 = vadd.f32 %v593, %v632
    %v674 = vadd.f32 %v594, %v636
    %v675 = vadd.f32 %v595, %v640
    %v676 = vadd.f32 %v596, %v644
    %v677 = vadd.f32 %v597, %v632
    %v678 = vadd.f32 %v598, %v636
    %v679 = vadd.f32 %v599, %v640
    %v680 = vadd.f32 %v600, %v644
    %v681 = vadd.f32 %v601, %v632
    %v682 = vadd.f32 %v602, %v636
    %v683 = vadd.f32 %v603, %v640
    %v684 = vadd.f32 %v604, %v644
    %v685 = vadd.f32 %v605, %v632
    %v686 = vadd.f32 %v606, %v636
    %v687 = vadd.f32 %v607, %v640
    %v688 = vadd.f32 %v608, %v644
    %v689 = vadd.f32 %v609, %v632
    %v690 = vadd.f32 %v610, %v636
    %v691 = vadd.f32 %v611, %v640
    %v692 = vadd.f32 %v612, %v644
    %v693 = vadd.f32 %v613, %v632
    %v694 = vadd.f32 %v614, %v636
    %v695 = vadd.f32 %v615, %v640
    %v696 = vadd.f32 %v616, %v644
    %v697 = vadd.f32 %v617, %v632
    %v698 = vadd.f32 %v618, %v636
    %v699 = vadd.f32 %v619, %v640
    %v700 = vadd.f32 %v620, %v644
    %v701 = vadd.f32 %v621, %v632
    %v702 = vadd.f32 %v622, %v636
    %v703 = vadd.f32 %v623, %v640
    %v704 = vadd.f32 %v624, %v644
    %v705 = vadd.f32 %v625, %v632
    %v706 = vadd.f32 %v626, %v636
    %v707 = vadd.f32 %v627, %v640
    %v708 = vadd.f32 %v628, %v644
    %v709 = vmax.f32 %v645, 0.0
    %v710 = vmax.f32 %v646, 0.0
    %v711 = vmax.f32 %v647, 0.0
    %v712 = vmax.f32 %v648, 0.0
    %v713 = vmax.f32 %v649, 0.0
    %v714 = vmax.f32 %v650, 0.0
    %v715 = vmax.f32 %v651, 0.0
    %v716 = vmax.f32 %v652, 0.0
    %v717 = vmax.f32 %v653, 0.0
    %v718 = vmax.f32 %v654, 0.0
    %v719 = vmax.f32 %v655, 0.0
    %v720 = vmax.f32 %v656, 0.0
    %v721 = vmax.f32 %v657, 0.0
    %v722 = vmax.f32 %v658, 0.0
    %v723 = vmax.f32 %v659, 0.0
    %v724 = vmax.f32 %v660, 0.0
    %v725 = vmax.f32 %v661, 0.0
    %v726 = vmax.f32 %v662, 0.0
    %v727 = vmax.f32 %v663, 0.0
    %v728 = vmax.f32 %v664, 0.0
    %v729 = vmax.f32 %v665, 0.0
    %v730 = vmax.f32 %v666, 0.0
    %v731 = vmax.f32 %v667, 0.0
    %v732 = vmax.f32 %v668, 0.0
    %v733 = vmax.f32 %v669, 0.0
    %v734 = vmax.f32 %v670, 0.0
    %v735 = vmax.f32 %v671, 0.0
    %v736 = vmax.f32 %v672, 0.0
    %v737 = vmax.f32 %v673, 0.0
    %v738 = vmax.f32 %v674, 0.0
    %v739 = vmax.f32 %v675, 0.0
    %v740 = vmax.f32 %v676, 0.0
    %v741 = vmax.f32 %v677, 0.0
    %v742 = vmax.f32 %v678, 0.0
    %v743 = vmax.f32 %v679, 0.0
    %v744 = vmax.f32 %v680, 0.0
    %v745 = vmax.f32 %v681, 0.0
    %v746 = vmax.f32 %v682, 0.0
    %v747 = vmax.f32 %v683, 0.0
    %v748 = vmax.f32 %v684, 0.0
    %v749 = vmax.f32 %v685, 0.0
    %v750 = vmax.f32 %v686, 0.0
    %v751 = vmax.f32 %v687, 0.0
    %v752 = vmax.f32 %v688, 0.0
    %v753 = vmax.f32 %v689, 0.0
    %v754 = vmax.f32 %v690, 0.0
    %v755 = vmax.f32 %v691, 0.0
    %v756 = vmax.f32 %v692, 0.0
    %v757 = vmax.f32 %v693, 0.0
    %v758 = vmax.f32 %v694, 0.0
    %v759 = vmax.f32 %v695, 0.0
    %v760 = vmax.f32 %v696, 0.0
    %v761 = vmax.f32 %v697, 0.0
    %v762 = vmax.f32 %v698, 0.0
    %v763 = vmax.f32 %v699, 0.0
    %v764 = vmax.f32 %v700, 0.0
    %v765 = vmax.f32 %v701, 0.0
    %v766 = vmax.f32 %v702, 0.0
    %v767 = vmax.f32 %v703, 0.0
    %v768 = vmax.f32 %v704, 0.0
    %v769 = vmax.f32 %v705, 0.0
    %v770 = vmax.f32 %v706, 0.0
    %v771 = vmax.f32 %v707, 0.0
    %v772 = vmax.f32 %v708, 0.0
    %v773 = vld [vmem:[#allocation2] sm:$0xff]
    %v774 = vld [vmem:[#allocation2 + $0x8] sm:$0xff]
    %v775 = vld [vmem:[#allocation2 + $0x10] sm:$0xff]
    %v776 = vld [vmem:[#allocation2 + $0x18] sm:$0xff]
    %v777 = vld [vmem:[#allocation2 + $0x20] sm:$0xff]
    %v778 = vld [vmem:[#allocation2 + $0x28] sm:$0xff]
    %v779 = vld [vmem:[#allocation2 + $0x30] sm:$0xff]
    %v780 = vld [vmem:[#allocation2 + $0x38] sm:$0xff]
    %v781 = vld [vmem:[#allocation2 + $0x40] sm:$0xff]
    %v782 = vld [vmem:[#allocation2 + $0x48] sm:$0xff]
    %v783 = vld [vmem:[#allocation2 + $0x50] sm:$0xff]
    %v784 = vld [vmem:[#allocation2 + $0x58] sm:$0xff]
    %v785 = vld [vmem:[#allocation2 + $0x60] sm:$0xff]
    %v786 = vld [vmem:[#allocation2 + $0x68] sm:$0xff]
    %v787 = vld [vmem:[#allocation2 + $0x70] sm:$0xff]
    %v788 = vld [vmem:[#allocation2 + $0x78] sm:$0xff]
    %v789 = vld [vmem:[#allocation2 + $0x80] sm:$0xff]
    %v790 = vld [vmem:[#allocation2 + $0x88] sm:$0xff]
    %v791 = vld [vmem:[#allocation2 + $0x90] sm:$0xff]
    %v792 = vld [vmem:[#allocation2 + $0x98] sm:$0xff]
    %v793 = vld [vmem:[#allocation2 + $0xa0] sm:$0xff]
    %v794 = vld [vmem:[#allocation2 + $0xa8] sm:$0xff]
    %v795 = vld [vmem:[#allocation2 + $0xb0] sm:$0xff]
    %v796 = vld [vmem:[#allocation2 + $0xb8] sm:$0xff]
    %v797 = vld [vmem:[#allocation2 + $0xc0] sm:$0xff]
    %v798 = vld [vmem:[#allocation2 + $0xc8] sm:$0xff]
    %v799 = vld [vmem:[#allocation2 + $0xd0] sm:$0xff]
    %v800 = vld [vmem:[#allocation2 + $0xd8] sm:$0xff]
    %v801 = vld [vmem:[#allocation2 + $0xe0] sm:$0xff]
    %v802 = vld [vmem:[#allocation2 + $0xe8] sm:$0xff]
    %v803 = vld [vmem:[#allocation2 + $0xf0] sm:$0xff]
    %v804 = vld [vmem:[#allocation2 + $0xf8] sm:$0xff]
    %v805 = vld [vmem:[#allocation2 + $0x100] sm:$0xff]
    %v806 = vld [vmem:[#allocation2 + $0x108] sm:$0xff]
    %v807 = vld [vmem:[#allocation2 + $0x110] sm:$0xff]
    %v808 = vld [vmem:[#allocation2 + $0x118] sm:$0xff]
    %v809 = vld [vmem:[#allocation2 + $0x120] sm:$0xff]
    %v810 = vld [vmem:[#allocation2 + $0x128] sm:$0xff]
    %v811 = vld [vmem:[#allocation2 + $0x130] sm:$0xff]
    %v812 = vld [vmem:[#allocation2 + $0x138] sm:$0xff]
    %v813 = vld [vmem:[#allocation2 + $0x140] sm:$0xff]
    %v814 = vld [vmem:[#allocation2 + $0x148] sm:$0xff]
    %v815 = vld [vmem:[#allocation2 + $0x150] sm:$0xff]
    %v816 = vld [vmem:[#allocation2 + $0x158] sm:$0xff]
    %v817 = vld [vmem:[#allocation2 + $0x160] sm:$0xff]
    %v818 = vld [vmem:[#allocation2 + $0x168] sm:$0xff]
    %v819 = vld [vmem:[#allocation2 + $0x170] sm:$0xff]
    %v820 = vld [vmem:[#allocation2 + $0x178] sm:$0xff]
    %v821 = vld [vmem:[#allocation2 + $0x180] sm:$0xff]
    %v822 = vld [vmem:[#allocation2 + $0x188] sm:$0xff]
    %v823 = vld [vmem:[#allocation2 + $0x190] sm:$0xff]
    %v824 = vld [vmem:[#allocation2 + $0x198] sm:$0xff]
    %v825 = vld [vmem:[#allocation2 + $0x1a0] sm:$0xff]
    %v826 = vld [vmem:[#allocation2 + $0x1a8] sm:$0xff]
    %v827 = vld [vmem:[#allocation2 + $0x1b0] sm:$0xff]
    %v828 = vld [vmem:[#allocation2 + $0x1b8] sm:$0xff]
    %v829 = vld [vmem:[#allocation2 + $0x1c0] sm:$0xff]
    %v830 = vld [vmem:[#allocation2 + $0x1c8] sm:$0xff]
    %v831 = vld [vmem:[#allocation2 + $0x1d0] sm:$0xff]
    %v832 = vld [vmem:[#allocation2 + $0x1d8] sm:$0xff]
    %v833 = vld [vmem:[#allocation2 + $0x1e0] sm:$0xff]
    %v834 = vld [vmem:[#allocation2 + $0x1e8] sm:$0xff]
    %v835 = vld [vmem:[#allocation2 + $0x1f0] sm:$0xff]
    %v836 = vld [vmem:[#allocation2 + $0x1f8] sm:$0xff]
    %v837 = vld [vmem:[#allocation2 + $0x200] sm:$0xff]
    %v838 = vld [vmem:[#allocation2 + $0x208] sm:$0xff]
    %v839 = vld [vmem:[#allocation2 + $0x210] sm:$0xff]
    %v840 = vld [vmem:[#allocation2 + $0x218] sm:$0xff]
    %v841 = vld [vmem:[#allocation2 + $0x220] sm:$0xff]
    %v842 = vld [vmem:[#allocation2 + $0x228] sm:$0xff]
    %v843 = vld [vmem:[#allocation2 + $0x230] sm:$0xff]
    %v844 = vld [vmem:[#allocation2 + $0x238] sm:$0xff]
    %v845 = vld [vmem:[#allocation2 + $0x240] sm:$0xff]
    %v846 = vld [vmem:[#allocation2 + $0x248] sm:$0xff]
    %v847 = vld [vmem:[#allocation2 + $0x250] sm:$0xff]
    %v848 = vld [vmem:[#allocation2 + $0x258] sm:$0xff]
    %v849 = vld [vmem:[#allocation2 + $0x260] sm:$0xff]
    %v850 = vld [vmem:[#allocation2 + $0x268] sm:$0xff]
    %v851 = vld [vmem:[#allocation2 + $0x270] sm:$0xff]
    %v852 = vld [vmem:[#allocation2 + $0x278] sm:$0xff]
    %v853 = vld [vmem:[#allocation2 + $0x280] sm:$0xff]
    %v854 = vld [vmem:[#allocation2 + $0x288] sm:$0xff]
    %v855 = vld [vmem:[#allocation2 + $0x290] sm:$0xff]
    %v856 = vld [vmem:[#allocation2 + $0x298] sm:$0xff]
    %v857 = vld [vmem:[#allocation2 + $0x2a0] sm:$0xff]
    %v858 = vld [vmem:[#allocation2 + $0x2a8] sm:$0xff]
    %v859 = vld [vmem:[#allocation2 + $0x2b0] sm:$0xff]
    %v860 = vld [vmem:[#allocation2 + $0x2b8] sm:$0xff]
    %v861 = vld [vmem:[#allocation2 + $0x2c0] sm:$0xff]
    %v862 = vld [vmem:[#allocation2 + $0x2c8] sm:$0xff]
    %v863 = vld [vmem:[#allocation2 + $0x2d0] sm:$0xff]
    %v864 = vld [vmem:[#allocation2 + $0x2d8] sm:$0xff]
    %v865 = vld [vmem:[#allocation2 + $0x2e0] sm:$0xff]
    %v866 = vld [vmem:[#allocation2 + $0x2e8] sm:$0xff]
    %v867 = vld [vmem:[#allocation2 + $0x2f0] sm:$0xff]
    %v868 = vld [vmem:[#allocation2 + $0x2f8] sm:$0xff]
    %v869 = vld [vmem:[#allocation2 + $0x300] sm:$0xff]
    %v870 = vld [vmem:[#allocation2 + $0x308] sm:$0xff]
    %v871 = vld [vmem:[#allocation2 + $0x310] sm:$0xff]
    %v872 = vld [vmem:[#allocation2 + $0x318] sm:$0xff]
    %v873 = vld [vmem:[#allocation2 + $0x320] sm:$0xff]
    %v874 = vld [vmem:[#allocation2 + $0x328] sm:$0xff]
    %v875 = vld [vmem:[#allocation2 + $0x330] sm:$0xff]
    %v876 = vld [vmem:[#allocation2 + $0x338] sm:$0xff]
    %v877 = vld [vmem:[#allocation2 + $0x340] sm:$0xff]
    %v878 = vld [vmem:[#allocation2 + $0x348] sm:$0xff]
    %v879 = vld [vmem:[#allocation2 + $0x350] sm:$0xff]
    %v880 = vld [vmem:[#allocation2 + $0x358] sm:$0xff]
    %v881 = vld [vmem:[#allocation2 + $0x360] sm:$0xff]
    %v882 = vld [vmem:[#allocation2 + $0x368] sm:$0xff]
    %v883 = vld [vmem:[#allocation2 + $0x370] sm:$0xff]
    %v884 = vld [vmem:[#allocation2 + $0x378] sm:$0xff]
    %v885 = vld [vmem:[#allocation2 + $0x380] sm:$0xff]
    %v886 = vld [vmem:[#allocation2 + $0x388] sm:$0xff]
    %v887 = vld [vmem:[#allocation2 + $0x390] sm:$0xff]
    %v888 = vld [vmem:[#allocation2 + $0x398] sm:$0xff]
    %v889 = vld [vmem:[#allocation2 + $0x3a0] sm:$0xff]
    %v890 = vld [vmem:[#allocation2 + $0x3a8] sm:$0xff]
    %v891 = vld [vmem:[#allocation2 + $0x3b0] sm:$0xff]
    %v892 = vld [vmem:[#allocation2 + $0x3b8] sm:$0xff]
    %v893 = vld [vmem:[#allocation2 + $0x3c0] sm:$0xff]
    %v894 = vld [vmem:[#allocation2 + $0x3c8] sm:$0xff]
    %v895 = vld [vmem:[#allocation2 + $0x3d0] sm:$0xff]
    %v896 = vld [vmem:[#allocation2 + $0x3d8] sm:$0xff]
    %v897 = vld [vmem:[#allocation2 + $0x3e0] sm:$0xff]
    %v898 = vld [vmem:[#allocation2 + $0x3e8] sm:$0xff]
    %v899 = vld [vmem:[#allocation2 + $0x3f0] sm:$0xff]
    %v900 = vld [vmem:[#allocation2 + $0x3f8] sm:$0xff]
    %v901 = vld [vmem:[#allocation2 + $0x400] sm:$0x44]
    %v902 = vld [vmem:[#allocation2 + $0x408] sm:$0x44]
    %v903 = vunpack.c.l.bf16 %v901
    %v904 = vunpack.c.h.bf16 %v901
    %v905 = vunpack.c.l.bf16 %v902
    %v906 = vunpack.c.h.bf16 %v902
    %v907 = vpack.c.bf16 %v713, %v709
    %v908 = vpack.c.bf16 %v714, %v710
    %v909 = vpack.c.bf16 %v715, %v711
    %v910 = vpack.c.bf16 %v716, %v712
    %v911 = vpack.c.bf16 %v721, %v717
    %v912 = vpack.c.bf16 %v722, %v718
    %v913 = vpack.c.bf16 %v723, %v719
    %v914 = vpack.c.bf16 %v724, %v720
    %v915 = vpack.c.bf16 %v729, %v725
    %v916 = vpack.c.bf16 %v730, %v726
    %v917 = vpack.c.bf16 %v731, %v727
    %v918 = vpack.c.bf16 %v732, %v728
    %v919 = vpack.c.bf16 %v737, %v733
    %v920 = vpack.c.bf16 %v738, %v734
    %v921 = vpack.c.bf16 %v739, %v735
    %v922 = vpack.c.bf16 %v740, %v736
    %v923 = vpack.c.bf16 %v745, %v741
    %v924 = vpack.c.bf16 %v746, %v742
    %v925 = vpack.c.bf16 %v747, %v743
    %v926 = vpack.c.bf16 %v748, %v744
    %v927 = vpack.c.bf16 %v753, %v749
    %v928 = vpack.c.bf16 %v754, %v750
    %v929 = vpack.c.bf16 %v755, %v751
    %v930 = vpack.c.bf16 %v756, %v752
    %v931 = vpack.c.bf16 %v761, %v757
    %v932 = vpack.c.bf16 %v762, %v758
    %v933 = vpack.c.bf16 %v763, %v759
    %v934 = vpack.c.bf16 %v764, %v760
    %v935 = vpack.c.bf16 %v769, %v765
    %v936 = vpack.c.bf16 %v770, %v766
    %v937 = vpack.c.bf16 %v771, %v767
    %v938 = vpack.c.bf16 %v772, %v768
    %v939 = vlaneseq
    %v940 = vshrl.u32 %v939, 7
    %v941 = vsub.s32 4, %v940
    %v942 = vrot.slane %v903, %v941
    %v943 = vlaneseq
    %v944 = vshrl.u32 %v943, 7
    %v945 = vsub.s32 4, %v944
    %v946 = vrot.slane %v904, %v945
    %v947 = vlaneseq
    %v948 = vshrl.u32 %v947, 7
    %v949 = vsub.s32 4, %v948
    %v950 = vrot.slane %v905, %v949
    %v951 = vlaneseq
    %v952 = vshrl.u32 %v951, 7
    %v953 = vsub.s32 4, %v952
    %v954 = vrot.slane %v906, %v953
    %v1083 = vunpack.c.l.b16 %v773
    %v1084 = vunpack.c.h.b16 %v773
    %v1085 = vunpack.c.l.b16 %v774
    %v1086 = vunpack.c.h.b16 %v774
    %v1087 = vunpack.c.l.b16 %v775
    %v1088 = vunpack.c.h.b16 %v775
    %v1089 = vunpack.c.l.b16 %v776
    %v1090 = vunpack.c.h.b16 %v776
    %v1091 = vunpack.c.l.b16 %v777
    %v1092 = vunpack.c.h.b16 %v777
    %v1093 = vunpack.c.l.b16 %v778
    %v1094 = vunpack.c.h.b16 %v778
    %v1095 = vunpack.c.l.b16 %v779
    %v1096 = vunpack.c.h.b16 %v779
    %v1097 = vunpack.c.l.b16 %v780
    %v1098 = vunpack.c.h.b16 %v780
    %v1099 = vunpack.c.l.b16 %v781
    %v1100 = vunpack.c.h.b16 %v781
    %v1101 = vunpack.c.l.b16 %v782
    %v1102 = vunpack.c.h.b16 %v782
    %v1103 = vunpack.c.l.b16 %v783
    %v1104 = vunpack.c.h.b16 %v783
    %v1105 = vunpack.c.l.b16 %v784
    %v1106 = vunpack.c.h.b16 %v784
    %v1107 = vunpack.c.l.b16 %v785
    %v1108 = vunpack.c.h.b16 %v785
    %v1109 = vunpack.c.l.b16 %v786
    %v1110 = vunpack.c.h.b16 %v786
    %v1111 = vunpack.c.l.b16 %v787
    %v1112 = vunpack.c.h.b16 %v787
    %v1113 = vunpack.c.l.b16 %v788
    %v1114 = vunpack.c.h.b16 %v788
    %v1115 = vunpack.c.l.b16 %v789
    %v1116 = vunpack.c.h.b16 %v789
    %v1117 = vunpack.c.l.b16 %v790
    %v1118 = vunpack.c.h.b16 %v790
    %v1119 = vunpack.c.l.b16 %v791
    %v1120 = vunpack.c.h.b16 %v791
    %v1121 = vunpack.c.l.b16 %v792
    %v1122 = vunpack.c.h.b16 %v792
    %v1123 = vunpack.c.l.b16 %v793
    %v1124 = vunpack.c.h.b16 %v793
    %v1125 = vunpack.c.l.b16 %v794
    %v1126 = vunpack.c.h.b16 %v794
    %v1127 = vunpack.c.l.b16 %v795
    %v1128 = vunpack.c.h.b16 %v795
    %v1129 = vunpack.c.l.b16 %v796
    %v1130 = vunpack.c.h.b16 %v796
    %v1131 = vunpack.c.l.b16 %v797
    %v1132 = vunpack.c.h.b16 %v797
    %v1133 = vunpack.c.l.b16 %v798
    %v1134 = vunpack.c.h.b16 %v798
    %v1135 = vunpack.c.l.b16 %v799
    %v1136 = vunpack.c.h.b16 %v799
    %v1137 = vunpack.c.l.b16 %v800
    %v1138 = vunpack.c.h.b16 %v800
    %v1139 = vunpack.c.l.b16 %v801
    %v1140 = vunpack.c.h.b16 %v801
    %v1141 = vunpack.c.l.b16 %v802
    %v1142 = vunpack.c.h.b16 %v802
    %v1143 = vunpack.c.l.b16 %v803
    %v1144 = vunpack.c.h.b16 %v803
    %v1145 = vunpack.c.l.b16 %v804
    %v1146 = vunpack.c.h.b16 %v804
    %v1147 = vunpack.c.l.b16 %v805
    %v1148 = vunpack.c.h.b16 %v805
    %v1149 = vunpack.c.l.b16 %v806
    %v1150 = vunpack.c.h.b16 %v806
    %v1151 = vunpack.c.l.b16 %v807
    %v1152 = vunpack.c.h.b16 %v807
    %v1153 = vunpack.c.l.b16 %v808
    %v1154 = vunpack.c.h.b16 %v808
    %v1155 = vunpack.c.l.b16 %v809
    %v1156 = vunpack.c.h.b16 %v809
    %v1157 = vunpack.c.l.b16 %v810
    %v1158 = vunpack.c.h.b16 %v810
    %v1159 = vunpack.c.l.b16 %v811
    %v1160 = vunpack.c.h.b16 %v811
    %v1161 = vunpack.c.l.b16 %v812
    %v1162 = vunpack.c.h.b16 %v812
    %v1163 = vunpack.c.l.b16 %v813
    %v1164 = vunpack.c.h.b16 %v813
    %v1165 = vunpack.c.l.b16 %v814
    %v1166 = vunpack.c.h.b16 %v814
    %v1167 = vunpack.c.l.b16 %v815
    %v1168 = vunpack.c.h.b16 %v815
    %v1169 = vunpack.c.l.b16 %v816
    %v1170 = vunpack.c.h.b16 %v816
    %v1171 = vunpack.c.l.b16 %v817
    %v1172 = vunpack.c.h.b16 %v817
    %v1173 = vunpack.c.l.b16 %v818
    %v1174 = vunpack.c.h.b16 %v818
    %v1175 = vunpack.c.l.b16 %v819
    %v1176 = vunpack.c.h.b16 %v819
    %v1177 = vunpack.c.l.b16 %v820
    %v1178 = vunpack.c.h.b16 %v820
    %v1179 = vunpack.c.l.b16 %v821
    %v1180 = vunpack.c.h.b16 %v821
    %v1181 = vunpack.c.l.b16 %v822
    %v1182 = vunpack.c.h.b16 %v822
    %v1183 = vunpack.c.l.b16 %v823
    %v1184 = vunpack.c.h.b16 %v823
    %v1185 = vunpack.c.l.b16 %v824
    %v1186 = vunpack.c.h.b16 %v824
    %v1187 = vunpack.c.l.b16 %v825
    %v1188 = vunpack.c.h.b16 %v825
    %v1189 = vunpack.c.l.b16 %v826
    %v1190 = vunpack.c.h.b16 %v826
    %v1191 = vunpack.c.l.b16 %v827
    %v1192 = vunpack.c.h.b16 %v827
    %v1193 = vunpack.c.l.b16 %v828
    %v1194 = vunpack.c.h.b16 %v828
    %v1195 = vunpack.c.l.b16 %v829
    %v1196 = vunpack.c.h.b16 %v829
    %v1197 = vunpack.c.l.b16 %v830
    %v1198 = vunpack.c.h.b16 %v830
    %v1199 = vunpack.c.l.b16 %v831
    %v1200 = vunpack.c.h.b16 %v831
    %v1201 = vunpack.c.l.b16 %v832
    %v1202 = vunpack.c.h.b16 %v832
    %v1203 = vunpack.c.l.b16 %v833
    %v1204 = vunpack.c.h.b16 %v833
    %v1205 = vunpack.c.l.b16 %v834
    %v1206 = vunpack.c.h.b16 %v834
    %v1207 = vunpack.c.l.b16 %v835
    %v1208 = vunpack.c.h.b16 %v835
    %v1209 = vunpack.c.l.b16 %v836
    %v1210 = vunpack.c.h.b16 %v836
    %v1211 = vunpack.c.l.b16 %v837
    %v1212 = vunpack.c.h.b16 %v837
    %v1213 = vunpack.c.l.b16 %v838
    %v1214 = vunpack.c.h.b16 %v838
    %v1215 = vunpack.c.l.b16 %v839
    %v1216 = vunpack.c.h.b16 %v839
    %v1217 = vunpack.c.l.b16 %v840
    %v1218 = vunpack.c.h.b16 %v840
    %v1219 = vunpack.c.l.b16 %v841
    %v1220 = vunpack.c.h.b16 %v841
    %v1221 = vunpack.c.l.b16 %v842
    %v1222 = vunpack.c.h.b16 %v842
    %v1223 = vunpack.c.l.b16 %v843
    %v1224 = vunpack.c.h.b16 %v843
    %v1225 = vunpack.c.l.b16 %v844
    %v1226 = vunpack.c.h.b16 %v844
    %v1227 = vunpack.c.l.b16 %v845
    %v1228 = vunpack.c.h.b16 %v845
    %v1229 = vunpack.c.l.b16 %v846
    %v1230 = vunpack.c.h.b16 %v846
    %v1231 = vunpack.c.l.b16 %v847
    %v1232 = vunpack.c.h.b16 %v847
    %v1233 = vunpack.c.l.b16 %v848
    %v1234 = vunpack.c.h.b16 %v848
    %v1235 = vunpack.c.l.b16 %v849
    %v1236 = vunpack.c.h.b16 %v849
    %v1237 = vunpack.c.l.b16 %v850
    %v1238 = vunpack.c.h.b16 %v850
    %v1239 = vunpack.c.l.b16 %v851
    %v1240 = vunpack.c.h.b16 %v851
    %v1241 = vunpack.c.l.b16 %v852
    %v1242 = vunpack.c.h.b16 %v852
    %v1243 = vunpack.c.l.b16 %v853
    %v1244 = vunpack.c.h.b16 %v853
    %v1245 = vunpack.c.l.b16 %v854
    %v1246 = vunpack.c.h.b16 %v854
    %v1247 = vunpack.c.l.b16 %v855
    %v1248 = vunpack.c.h.b16 %v855
    %v1249 = vunpack.c.l.b16 %v856
    %v1250 = vunpack.c.h.b16 %v856
    %v1251 = vunpack.c.l.b16 %v857
    %v1252 = vunpack.c.h.b16 %v857
    %v1253 = vunpack.c.l.b16 %v858
    %v1254 = vunpack.c.h.b16 %v858
    %v1255 = vunpack.c.l.b16 %v859
    %v1256 = vunpack.c.h.b16 %v859
    %v1257 = vunpack.c.l.b16 %v860
    %v1258 = vunpack.c.h.b16 %v860
    %v1259 = vunpack.c.l.b16 %v861
    %v1260 = vunpack.c.h.b16 %v861
    %v1261 = vunpack.c.l.b16 %v862
    %v1262 = vunpack.c.h.b16 %v862
    %v1263 = vunpack.c.l.b16 %v863
    %v1264 = vunpack.c.h.b16 %v863
    %v1265 = vunpack.c.l.b16 %v864
    %v1266 = vunpack.c.h.b16 %v864
    %v1267 = vunpack.c.l.b16 %v865
    %v1268 = vunpack.c.h.b16 %v865
    %v1269 = vunpack.c.l.b16 %v866
    %v1270 = vunpack.c.h.b16 %v866
    %v1271 = vunpack.c.l.b16 %v867
    %v1272 = vunpack.c.h.b16 %v867
    %v1273 = vunpack.c.l.b16 %v868
    %v1274 = vunpack.c.h.b16 %v868
    %v1275 = vunpack.c.l.b16 %v869
    %v1276 = vunpack.c.h.b16 %v869
    %v1277 = vunpack.c.l.b16 %v870
    %v1278 = vunpack.c.h.b16 %v870
    %v1279 = vunpack.c.l.b16 %v871
    %v1280 = vunpack.c.h.b16 %v871
    %v1281 = vunpack.c.l.b16 %v872
    %v1282 = vunpack.c.h.b16 %v872
    %v1283 = vunpack.c.l.b16 %v873
    %v1284 = vunpack.c.h.b16 %v873
    %v1285 = vunpack.c.l.b16 %v874
    %v1286 = vunpack.c.h.b16 %v874
    %v1287 = vunpack.c.l.b16 %v875
    %v1288 = vunpack.c.h.b16 %v875
    %v1289 = vunpack.c.l.b16 %v876
    %v1290 = vunpack.c.h.b16 %v876
    %v1291 = vunpack.c.l.b16 %v877
    %v1292 = vunpack.c.h.b16 %v877
    %v1293 = vunpack.c.l.b16 %v878
    %v1294 = vunpack.c.h.b16 %v878
    %v1295 = vunpack.c.l.b16 %v879
    %v1296 = vunpack.c.h.b16 %v879
    %v1297 = vunpack.c.l.b16 %v880
    %v1298 = vunpack.c.h.b16 %v880
    %v1299 = vunpack.c.l.b16 %v881
    %v1300 = vunpack.c.h.b16 %v881
    %v1301 = vunpack.c.l.b16 %v882
    %v1302 = vunpack.c.h.b16 %v882
    %v1303 = vunpack.c.l.b16 %v883
    %v1304 = vunpack.c.h.b16 %v883
    %v1305 = vunpack.c.l.b16 %v884
    %v1306 = vunpack.c.h.b16 %v884
    %v1307 = vunpack.c.l.b16 %v885
    %v1308 = vunpack.c.h.b16 %v885
    %v1309 = vunpack.c.l.b16 %v886
    %v1310 = vunpack.c.h.b16 %v886
    %v1311 = vunpack.c.l.b16 %v887
    %v1312 = vunpack.c.h.b16 %v887
    %v1313 = vunpack.c.l.b16 %v888
    %v1314 = vunpack.c.h.b16 %v888
    %v1315 = vunpack.c.l.b16 %v889
    %v1316 = vunpack.c.h.b16 %v889
    %v1317 = vunpack.c.l.b16 %v890
    %v1318 = vunpack.c.h.b16 %v890
    %v1319 = vunpack.c.l.b16 %v891
    %v1320 = vunpack.c.h.b16 %v891
    %v1321 = vunpack.c.l.b16 %v892
    %v1322 = vunpack.c.h.b16 %v892
    %v1323 = vunpack.c.l.b16 %v893
    %v1324 = vunpack.c.h.b16 %v893
    %v1325 = vunpack.c.l.b16 %v894
    %v1326 = vunpack.c.h.b16 %v894
    %v1327 = vunpack.c.l.b16 %v895
    %v1328 = vunpack.c.h.b16 %v895
    %v1329 = vunpack.c.l.b16 %v896
    %v1330 = vunpack.c.h.b16 %v896
    %v1331 = vunpack.c.l.b16 %v897
    %v1332 = vunpack.c.h.b16 %v897
    %v1333 = vunpack.c.l.b16 %v898
    %v1334 = vunpack.c.h.b16 %v898
    %v1335 = vunpack.c.l.b16 %v899
    %v1336 = vunpack.c.h.b16 %v899
    %v1337 = vunpack.c.l.b16 %v900
    %v1338 = vunpack.c.h.b16 %v900
    %v1339 = vpack.c.b16 %v1087, %v1083
    %v1340 = vpack.c.b16 %v1088, %v1084
    %v1341 = vpack.c.b16 %v1089, %v1085
    %v1342 = vpack.c.b16 %v1090, %v1086
    %v1343 = vpack.c.b16 %v1095, %v1091
    %v1344 = vpack.c.b16 %v1096, %v1092
    %v1345 = vpack.c.b16 %v1097, %v1093
    %v1346 = vpack.c.b16 %v1098, %v1094
    %v1347 = vpack.c.b16 %v1103, %v1099
    %v1348 = vpack.c.b16 %v1104, %v1100
    %v1349 = vpack.c.b16 %v1105, %v1101
    %v1350 = vpack.c.b16 %v1106, %v1102
    %v1351 = vpack.c.b16 %v1111, %v1107
    %v1352 = vpack.c.b16 %v1112, %v1108
    %v1353 = vpack.c.b16 %v1113, %v1109
    %v1354 = vpack.c.b16 %v1114, %v1110
    %v1355 = vpack.c.b16 %v1119, %v1115
    %v1356 = vpack.c.b16 %v1120, %v1116
    %v1357 = vpack.c.b16 %v1121, %v1117
    %v1358 = vpack.c.b16 %v1122, %v1118
    %v1359 = vpack.c.b16 %v1127, %v1123
    %v1360 = vpack.c.b16 %v1128, %v1124
    %v1361 = vpack.c.b16 %v1129, %v1125
    %v1362 = vpack.c.b16 %v1130, %v1126
    %v1363 = vpack.c.b16 %v1135, %v1131
    %v1364 = vpack.c.b16 %v1136, %v1132
    %v1365 = vpack.c.b16 %v1137, %v1133
    %v1366 = vpack.c.b16 %v1138, %v1134
    %v1367 = vpack.c.b16 %v1143, %v1139
    %v1368 = vpack.c.b16 %v1144, %v1140
    %v1369 = vpack.c.b16 %v1145, %v1141
    %v1370 = vpack.c.b16 %v1146, %v1142
    %v1371 = vpack.c.b16 %v1151, %v1147
    %v1372 = vpack.c.b16 %v1152, %v1148
    %v1373 = vpack.c.b16 %v1153, %v1149
    %v1374 = vpack.c.b16 %v1154, %v1150
    %v1375 = vpack.c.b16 %v1159, %v1155
    %v1376 = vpack.c.b16 %v1160, %v1156
    %v1377 = vpack.c.b16 %v1161, %v1157
    %v1378 = vpack.c.b16 %v1162, %v1158
    %v1379 = vpack.c.b16 %v1167, %v1163
    %v1380 = vpack.c.b16 %v1168, %v1164
    %v1381 = vpack.c.b16 %v1169, %v1165
    %v1382 = vpack.c.b16 %v1170, %v1166
    %v1383 = vpack.c.b16 %v1175, %v1171
    %v1384 = vpack.c.b16 %v1176, %v1172
    %v1385 = vpack.c.b16 %v1177, %v1173
    %v1386 = vpack.c.b16 %v1178, %v1174
    %v1387 = vpack.c.b16 %v1183, %v1179
    %v1388 = vpack.c.b16 %v1184, %v1180
    %v1389 = vpack.c.b16 %v1185, %v1181
    %v1390 = vpack.c.b16 %v1186, %v1182
    %v1391 = vpack.c.b16 %v1191, %v1187
    %v1392 = vpack.c.b16 %v1192, %v1188
    %v1393 = vpack.c.b16 %v1193, %v1189
    %v1394 = vpack.c.b16 %v1194, %v1190
    %v1395 = vpack.c.b16 %v1199, %v1195
    %v1396 = vpack.c.b16 %v1200, %v1196
    %v1397 = vpack.c.b16 %v1201, %v1197
    %v1398 = vpack.c.b16 %v1202, %v1198
    %v1399 = vpack.c.b16 %v1207, %v1203
    %v1400 = vpack.c.b16 %v1208, %v1204
    %v1401 = vpack.c.b16 %v1209, %v1205
    %v1402 = vpack.c.b16 %v1210, %v1206
    %v1403 = vpack.c.b16 %v1215, %v1211
    %v1404 = vpack.c.b16 %v1216, %v1212
    %v1405 = vpack.c.b16 %v1217, %v1213
    %v1406 = vpack.c.b16 %v1218, %v1214
    %v1407 = vpack.c.b16 %v1223, %v1219
    %v1408 = vpack.c.b16 %v1224, %v1220
    %v1409 = vpack.c.b16 %v1225, %v1221
    %v1410 = vpack.c.b16 %v1226, %v1222
    %v1411 = vpack.c.b16 %v1231, %v1227
    %v1412 = vpack.c.b16 %v1232, %v1228
    %v1413 = vpack.c.b16 %v1233, %v1229
    %v1414 = vpack.c.b16 %v1234, %v1230
    %v1415 = vpack.c.b16 %v1239, %v1235
    %v1416 = vpack.c.b16 %v1240, %v1236
    %v1417 = vpack.c.b16 %v1241, %v1237
    %v1418 = vpack.c.b16 %v1242, %v1238
    %v1419 = vpack.c.b16 %v1247, %v1243
    %v1420 = vpack.c.b16 %v1248, %v1244
    %v1421 = vpack.c.b16 %v1249, %v1245
    %v1422 = vpack.c.b16 %v1250, %v1246
    %v1423 = vpack.c.b16 %v1255, %v1251
    %v1424 = vpack.c.b16 %v1256, %v1252
    %v1425 = vpack.c.b16 %v1257, %v1253
    %v1426 = vpack.c.b16 %v1258, %v1254
    %v1427 = vpack.c.b16 %v1263, %v1259
    %v1428 = vpack.c.b16 %v1264, %v1260
    %v1429 = vpack.c.b16 %v1265, %v1261
    %v1430 = vpack.c.b16 %v1266, %v1262
    %v1431 = vpack.c.b16 %v1271, %v1267
    %v1432 = vpack.c.b16 %v1272, %v1268
    %v1433 = vpack.c.b16 %v1273, %v1269
    %v1434 = vpack.c.b16 %v1274, %v1270
    %v1435 = vpack.c.b16 %v1279, %v1275
    %v1436 = vpack.c.b16 %v1280, %v1276
    %v1437 = vpack.c.b16 %v1281, %v1277
    %v1438 = vpack.c.b16 %v1282, %v1278
    %v1439 = vpack.c.b16 %v1287, %v1283
    %v1440 = vpack.c.b16 %v1288, %v1284
    %v1441 = vpack.c.b16 %v1289, %v1285
    %v1442 = vpack.c.b16 %v1290, %v1286
    %v1443 = vpack.c.b16 %v1295, %v1291
    %v1444 = vpack.c.b16 %v1296, %v1292
    %v1445 = vpack.c.b16 %v1297, %v1293
    %v1446 = vpack.c.b16 %v1298, %v1294
    %v1447 = vpack.c.b16 %v1303, %v1299
    %v1448 = vpack.c.b16 %v1304, %v1300
    %v1449 = vpack.c.b16 %v1305, %v1301
    %v1450 = vpack.c.b16 %v1306, %v1302
    %v1451 = vpack.c.b16 %v1311, %v1307
    %v1452 = vpack.c.b16 %v1312, %v1308
    %v1453 = vpack.c.b16 %v1313, %v1309
    %v1454 = vpack.c.b16 %v1314, %v1310
    %v1455 = vpack.c.b16 %v1319, %v1315
    %v1456 = vpack.c.b16 %v1320, %v1316
    %v1457 = vpack.c.b16 %v1321, %v1317
    %v1458 = vpack.c.b16 %v1322, %v1318
    %v1459 = vpack.c.b16 %v1327, %v1323
    %v1460 = vpack.c.b16 %v1328, %v1324
    %v1461 = vpack.c.b16 %v1329, %v1325
    %v1462 = vpack.c.b16 %v1330, %v1326
    %v1463 = vpack.c.b16 %v1335, %v1331
    %v1464 = vpack.c.b16 %v1336, %v1332
    %v1465 = vpack.c.b16 %v1337, %v1333
    %v1466 = vpack.c.b16 %v1338, %v1334
    %1595 = vmatprep.subr.bf16.mxu0 %v1368
    %1596 = vmatpush1.bf16.msra.mxu0 %v1367
    %1597 = vmatprep.subr.bf16.mxu0 %v1364
    %1598 = vmatpush1.bf16.msra.mxu0 %v1363
    %1599 = vmatprep.subr.bf16.mxu0 %v1360
    %1600 = vmatpush1.bf16.msra.mxu0 %v1359
    %1601 = vmatprep.subr.bf16.mxu0 %v1356
    %1602 = vmatpush1.bf16.msra.mxu0 %v1355
    %1603 = vmatprep.subr.bf16.mxu0 %v1352
    %1604 = vmatpush1.bf16.msra.mxu0 %v1351
    %1605 = vmatprep.subr.bf16.mxu0 %v1348
    %1606 = vmatpush1.bf16.msra.mxu0 %v1347
    %1607 = vmatprep.subr.bf16.mxu0 %v1344
    %1608 = vmatpush1.bf16.msra.mxu0 %v1343
    %1609 = vmatprep.subr.bf16.mxu0 %v1340
    %1610 = vmatpush1.bf16.msra.mxu0 %v1339
    %1611 = vmatprep.subr.bf16.mxu0 %v1400
    %1612 = vmatpush2.bf16.msra.mxu0 %v1399
    %1613 = vmatprep.subr.bf16.mxu0 %v1396
    %1614 = vmatpush2.bf16.msra.mxu0 %v1395
    %1615 = vmatprep.subr.bf16.mxu0 %v1392
    %1616 = vmatpush2.bf16.msra.mxu0 %v1391
    %1617 = vmatprep.subr.bf16.mxu0 %v1388
    %1618 = vmatpush2.bf16.msra.mxu0 %v1387
    %1619 = vmatprep.subr.bf16.mxu0 %v1384
    %1620 = vmatpush2.bf16.msra.mxu0 %v1383
    %1621 = vmatprep.subr.bf16.mxu0 %v1380
    %1622 = vmatpush2.bf16.msra.mxu0 %v1379
    %1623 = vmatprep.subr.bf16.mxu0 %v1376
    %1624 = vmatpush2.bf16.msra.mxu0 %v1375
    %1625 = vmatprep.subr.bf16.mxu0 %v1372
    %1626 = vmatpush2.bf16.msra.mxu0 %v1371
    %1627 = vmatprep.mubr.bf16.mxu0 %v908
    %1628 = vmatmul.mubr.bf16.gmra.mxu0 %v907
    %v1629 = vpop.f32.mrf.mxu0
    %v1630 = vadd.f32 %v942, %v1629
    %v1631 = vpop.f32.mrf.mxu0
    %v1632 = vadd.f32 %v946, %v1631
    %v1633 = vpop.f32.mrf.mxu0
    %v1634 = vadd.f32 %v942, %v1633
    %v1635 = vpop.f32.mrf.mxu0
    %v1636 = vadd.f32 %v946, %v1635
    %1637 = vmatprep.mubr.bf16.mxu0 %v912
    %1638 = vmatmul.mubr.bf16.gmra.mxu0 %v911
    %v1639 = vpop.f32.mrf.mxu0
    %v1640 = vadd.f32 %v942, %v1639
    %v1641 = vpop.f32.mrf.mxu0
    %v1642 = vadd.f32 %v946, %v1641
    %v1643 = vpop.f32.mrf.mxu0
    %v1644 = vadd.f32 %v942, %v1643
    %v1645 = vpop.f32.mrf.mxu0
    %v1646 = vadd.f32 %v946, %v1645
    %1647 = vmatprep.mubr.bf16.mxu0 %v916
    %1648 = vmatmul.mubr.bf16.gmra.mxu0 %v915
    %v1649 = vpop.f32.mrf.mxu0
    %v1650 = vadd.f32 %v942, %v1649
    %v1651 = vpop.f32.mrf.mxu0
    %v1652 = vadd.f32 %v946, %v1651
    %v1653 = vpop.f32.mrf.mxu0
    %v1654 = vadd.f32 %v942, %v1653
    %v1655 = vpop.f32.mrf.mxu0
    %v1656 = vadd.f32 %v946, %v1655
    %1657 = vmatprep.mubr.bf16.mxu0 %v920
    %1658 = vmatmul.mubr.bf16.gmra.mxu0 %v919
    %v1659 = vpop.f32.mrf.mxu0
    %v1660 = vadd.f32 %v942, %v1659
    %v1661 = vpop.f32.mrf.mxu0
    %v1662 = vadd.f32 %v946, %v1661
    %v1663 = vpop.f32.mrf.mxu0
    %v1664 = vadd.f32 %v942, %v1663
    %v1665 = vpop.f32.mrf.mxu0
    %v1666 = vadd.f32 %v946, %v1665
    %1667 = vmatprep.mubr.bf16.mxu0 %v924
    %1668 = vmatmul.mubr.bf16.gmra.mxu0 %v923
    %v1669 = vpop.f32.mrf.mxu0
    %v1670 = vadd.f32 %v942, %v1669
    %v1671 = vpop.f32.mrf.mxu0
    %v1672 = vadd.f32 %v946, %v1671
    %v1673 = vpop.f32.mrf.mxu0
    %v1674 = vadd.f32 %v942, %v1673
    %v1675 = vpop.f32.mrf.mxu0
    %v1676 = vadd.f32 %v946, %v1675
    %1677 = vmatprep.mubr.bf16.mxu0 %v928
    %1678 = vmatmul.mubr.bf16.gmra.mxu0 %v927
    %v1679 = vpop.f32.mrf.mxu0
    %v1680 = vadd.f32 %v942, %v1679
    %v1681 = vpop.f32.mrf.mxu0
    %v1682 = vadd.f32 %v946, %v1681
    %v1683 = vpop.f32.mrf.mxu0
    %v1684 = vadd.f32 %v942, %v1683
    %v1685 = vpop.f32.mrf.mxu0
    %v1686 = vadd.f32 %v946, %v1685
    %1687 = vmatprep.mubr.bf16.mxu0 %v932
    %1688 = vmatmul.mubr.bf16.gmra.mxu0 %v931
    %v1689 = vpop.f32.mrf.mxu0
    %v1690 = vadd.f32 %v942, %v1689
    %v1691 = vpop.f32.mrf.mxu0
    %v1692 = vadd.f32 %v946, %v1691
    %v1693 = vpop.f32.mrf.mxu0
    %v1694 = vadd.f32 %v942, %v1693
    %v1695 = vpop.f32.mrf.mxu0
    %v1696 = vadd.f32 %v946, %v1695
    %1697 = vmatprep.mubr.bf16.mxu0 %v936
    %1698 = vmatmul.mubr.bf16.gmra.mxu0 %v935
    %v1699 = vpop.f32.mrf.mxu0
    %v1700 = vadd.f32 %v942, %v1699
    %v1701 = vpop.f32.mrf.mxu0
    %v1702 = vadd.f32 %v946, %v1701
    %v1703 = vpop.f32.mrf.mxu0
    %v1704 = vadd.f32 %v942, %v1703
    %v1705 = vpop.f32.mrf.mxu0
    %v1706 = vadd.f32 %v946, %v1705
    %1707 = vdwg.mxu0
    %1708 = vmatprep.subr.bf16.mxu0 %v1432
    %1709 = vmatpush1.bf16.msra.mxu0 %v1431
    %1710 = vmatprep.subr.bf16.mxu0 %v1428
    %1711 = vmatpush1.bf16.msra.mxu0 %v1427
    %1712 = vmatprep.subr.bf16.mxu0 %v1424
    %1713 = vmatpush1.bf16.msra.mxu0 %v1423
    %1714 = vmatprep.subr.bf16.mxu0 %v1420
    %1715 = vmatpush1.bf16.msra.mxu0 %v1419
    %1716 = vmatprep.subr.bf16.mxu0 %v1416
    %1717 = vmatpush1.bf16.msra.mxu0 %v1415
    %1718 = vmatprep.subr.bf16.mxu0 %v1412
    %1719 = vmatpush1.bf16.msra.mxu0 %v1411
    %1720 = vmatprep.subr.bf16.mxu0 %v1408
    %1721 = vmatpush1.bf16.msra.mxu0 %v1407
    %1722 = vmatprep.subr.bf16.mxu0 %v1404
    %1723 = vmatpush1.bf16.msra.mxu0 %v1403
    %1724 = vmatprep.subr.bf16.mxu0 %v1464
    %1725 = vmatpush2.bf16.msra.mxu0 %v1463
    %1726 = vmatprep.subr.bf16.mxu0 %v1460
    %1727 = vmatpush2.bf16.msra.mxu0 %v1459
    %1728 = vmatprep.subr.bf16.mxu0 %v1456
    %1729 = vmatpush2.bf16.msra.mxu0 %v1455
    %1730 = vmatprep.subr.bf16.mxu0 %v1452
    %1731 = vmatpush2.bf16.msra.mxu0 %v1451
    %1732 = vmatprep.subr.bf16.mxu0 %v1448
    %1733 = vmatpush2.bf16.msra.mxu0 %v1447
    %1734 = vmatprep.subr.bf16.mxu0 %v1444
    %1735 = vmatpush2.bf16.msra.mxu0 %v1443
    %1736 = vmatprep.subr.bf16.mxu0 %v1440
    %1737 = vmatpush2.bf16.msra.mxu0 %v1439
    %1738 = vmatprep.subr.bf16.mxu0 %v1436
    %1739 = vmatpush2.bf16.msra.mxu0 %v1435
    %1740 = vmatprep.mubr.bf16.mxu0 %v910
    %1741 = vmatmul.mubr.bf16.gmra.mxu0 %v909
    %v1742 = vpop.f32.mrf.mxu0
    %v1743 = vadd.f32 %v1630, %v1742
    %v1744 = vpop.f32.mrf.mxu0
    %v1745 = vadd.f32 %v1632, %v1744
    %v1746 = vpop.f32.mrf.mxu0
    %v1747 = vadd.f32 %v1634, %v1746
    %v1748 = vpop.f32.mrf.mxu0
    %v1749 = vadd.f32 %v1636, %v1748
    %1750 = vmatprep.mubr.bf16.mxu0 %v914
    %1751 = vmatmul.mubr.bf16.gmra.mxu0 %v913
    %v1752 = vpop.f32.mrf.mxu0
    %v1753 = vadd.f32 %v1640, %v1752
    %v1754 = vpop.f32.mrf.mxu0
    %v1755 = vadd.f32 %v1642, %v1754
    %v1756 = vpop.f32.mrf.mxu0
    %v1757 = vadd.f32 %v1644, %v1756
    %v1758 = vpop.f32.mrf.mxu0
    %v1759 = vadd.f32 %v1646, %v1758
    %1760 = vmatprep.mubr.bf16.mxu0 %v918
    %1761 = vmatmul.mubr.bf16.gmra.mxu0 %v917
    %v1762 = vpop.f32.mrf.mxu0
    %v1763 = vadd.f32 %v1650, %v1762
    %v1764 = vpop.f32.mrf.mxu0
    %v1765 = vadd.f32 %v1652, %v1764
    %v1766 = vpop.f32.mrf.mxu0
    %v1767 = vadd.f32 %v1654, %v1766
    %v1768 = vpop.f32.mrf.mxu0
    %v1769 = vadd.f32 %v1656, %v1768
    %1770 = vmatprep.mubr.bf16.mxu0 %v922
    %1771 = vmatmul.mubr.bf16.gmra.mxu0 %v921
    %v1772 = vpop.f32.mrf.mxu0
    %v1773 = vadd.f32 %v1660, %v1772
    %v1774 = vpop.f32.mrf.mxu0
    %v1775 = vadd.f32 %v1662, %v1774
    %v1776 = vpop.f32.mrf.mxu0
    %v1777 = vadd.f32 %v1664, %v1776
    %v1778 = vpop.f32.mrf.mxu0
    %v1779 = vadd.f32 %v1666, %v1778
    %1780 = vmatprep.mubr.bf16.mxu0 %v926
    %1781 = vmatmul.mubr.bf16.gmra.mxu0 %v925
    %v1782 = vpop.f32.mrf.mxu0
    %v1783 = vadd.f32 %v1670, %v1782
    %v1784 = vpop.f32.mrf.mxu0
    %v1785 = vadd.f32 %v1672, %v1784
    %v1786 = vpop.f32.mrf.mxu0
    %v1787 = vadd.f32 %v1674, %v1786
    %v1788 = vpop.f32.mrf.mxu0
    %v1789 = vadd.f32 %v1676, %v1788
    %1790 = vmatprep.mubr.bf16.mxu0 %v930
    %1791 = vmatmul.mubr.bf16.gmra.mxu0 %v929
    %v1792 = vpop.f32.mrf.mxu0
    %v1793 = vadd.f32 %v1680, %v1792
    %v1794 = vpop.f32.mrf.mxu0
    %v1795 = vadd.f32 %v1682, %v1794
    %v1796 = vpop.f32.mrf.mxu0
    %v1797 = vadd.f32 %v1684, %v1796
    %v1798 = vpop.f32.mrf.mxu0
    %v1799 = vadd.f32 %v1686, %v1798
    %1800 = vmatprep.mubr.bf16.mxu0 %v934
    %1801 = vmatmul.mubr.bf16.gmra.mxu0 %v933
    %v1802 = vpop.f32.mrf.mxu0
    %v1803 = vadd.f32 %v1690, %v1802
    %v1804 = vpop.f32.mrf.mxu0
    %v1805 = vadd.f32 %v1692, %v1804
    %v1806 = vpop.f32.mrf.mxu0
    %v1807 = vadd.f32 %v1694, %v1806
    %v1808 = vpop.f32.mrf.mxu0
    %v1809 = vadd.f32 %v1696, %v1808
    %1810 = vmatprep.mubr.bf16.mxu0 %v938
    %1811 = vmatmul.mubr.bf16.gmra.mxu0 %v937
    %v1812 = vpop.f32.mrf.mxu0
    %v1813 = vadd.f32 %v1700, %v1812
    %v1814 = vpop.f32.mrf.mxu0
    %v1815 = vadd.f32 %v1702, %v1814
    %v1816 = vpop.f32.mrf.mxu0
    %v1817 = vadd.f32 %v1704, %v1816
    %v1818 = vpop.f32.mrf.mxu0
    %v1819 = vadd.f32 %v1706, %v1818
    %1820 = vdwg.mxu0
    %1821 = vmatprep.subr.bf16.mxu0 %v1370
    %1822 = vmatpush1.bf16.msra.mxu0 %v1369
    %1823 = vmatprep.subr.bf16.mxu0 %v1366
    %1824 = vmatpush1.bf16.msra.mxu0 %v1365
    %1825 = vmatprep.subr.bf16.mxu0 %v1362
    %1826 = vmatpush1.bf16.msra.mxu0 %v1361
    %1827 = vmatprep.subr.bf16.mxu0 %v1358
    %1828 = vmatpush1.bf16.msra.mxu0 %v1357
    %1829 = vmatprep.subr.bf16.mxu0 %v1354
    %1830 = vmatpush1.bf16.msra.mxu0 %v1353
    %1831 = vmatprep.subr.bf16.mxu0 %v1350
    %1832 = vmatpush1.bf16.msra.mxu0 %v1349
    %1833 = vmatprep.subr.bf16.mxu0 %v1346
    %1834 = vmatpush1.bf16.msra.mxu0 %v1345
    %1835 = vmatprep.subr.bf16.mxu0 %v1342
    %1836 = vmatpush1.bf16.msra.mxu0 %v1341
    %1837 = vmatprep.subr.bf16.mxu0 %v1402
    %1838 = vmatpush2.bf16.msra.mxu0 %v1401
    %1839 = vmatprep.subr.bf16.mxu0 %v1398
    %1840 = vmatpush2.bf16.msra.mxu0 %v1397
    %1841 = vmatprep.subr.bf16.mxu0 %v1394
    %1842 = vmatpush2.bf16.msra.mxu0 %v1393
    %1843 = vmatprep.subr.bf16.mxu0 %v1390
    %1844 = vmatpush2.bf16.msra.mxu0 %v1389
    %1845 = vmatprep.subr.bf16.mxu0 %v1386
    %1846 = vmatpush2.bf16.msra.mxu0 %v1385
    %1847 = vmatprep.subr.bf16.mxu0 %v1382
    %1848 = vmatpush2.bf16.msra.mxu0 %v1381
    %1849 = vmatprep.subr.bf16.mxu0 %v1378
    %1850 = vmatpush2.bf16.msra.mxu0 %v1377
    %1851 = vmatprep.subr.bf16.mxu0 %v1374
    %1852 = vmatpush2.bf16.msra.mxu0 %v1373
    %1853 = vmatprep.mubr.bf16.mxu0 %v908
    %1854 = vmatmul.mubr.bf16.gmra.mxu0 %v907
    %v1855 = vpop.f32.mrf.mxu0
    %v1856 = vadd.f32 %v950, %v1855
    %v1857 = vpop.f32.mrf.mxu0
    %v1858 = vadd.f32 %v954, %v1857
    %v1859 = vpop.f32.mrf.mxu0
    %v1860 = vadd.f32 %v950, %v1859
    %v1861 = vpop.f32.mrf.mxu0
    %v1862 = vadd.f32 %v954, %v1861
    %1863 = vmatprep.mubr.bf16.mxu0 %v912
    %1864 = vmatmul.mubr.bf16.gmra.mxu0 %v911
    %v1865 = vpop.f32.mrf.mxu0
    %v1866 = vadd.f32 %v950, %v1865
    %v1867 = vpop.f32.mrf.mxu0
    %v1868 = vadd.f32 %v954, %v1867
    %v1869 = vpop.f32.mrf.mxu0
    %v1870 = vadd.f32 %v950, %v1869
    %v1871 = vpop.f32.mrf.mxu0
    %v1872 = vadd.f32 %v954, %v1871
    %1873 = vmatprep.mubr.bf16.mxu0 %v916
    %1874 = vmatmul.mubr.bf16.gmra.mxu0 %v915
    %v1875 = vpop.f32.mrf.mxu0
    %v1876 = vadd.f32 %v950, %v1875
    %v1877 = vpop.f32.mrf.mxu0
    %v1878 = vadd.f32 %v954, %v1877
    %v1879 = vpop.f32.mrf.mxu0
    %v1880 = vadd.f32 %v950, %v1879
    %v1881 = vpop.f32.mrf.mxu0
    %v1882 = vadd.f32 %v954, %v1881
    %1883 = vmatprep.mubr.bf16.mxu0 %v920
    %1884 = vmatmul.mubr.bf16.gmra.mxu0 %v919
    %v1885 = vpop.f32.mrf.mxu0
    %v1886 = vadd.f32 %v950, %v1885
    %v1887 = vpop.f32.mrf.mxu0
    %v1888 = vadd.f32 %v954, %v1887
    %v1889 = vpop.f32.mrf.mxu0
    %v1890 = vadd.f32 %v950, %v1889
    %v1891 = vpop.f32.mrf.mxu0
    %v1892 = vadd.f32 %v954, %v1891
    %1893 = vmatprep.mubr.bf16.mxu0 %v924
    %1894 = vmatmul.mubr.bf16.gmra.mxu0 %v923
    %v1895 = vpop.f32.mrf.mxu0
    %v1896 = vadd.f32 %v950, %v1895
    %v1897 = vpop.f32.mrf.mxu0
    %v1898 = vadd.f32 %v954, %v1897
    %v1899 = vpop.f32.mrf.mxu0
    %v1900 = vadd.f32 %v950, %v1899
    %v1901 = vpop.f32.mrf.mxu0
    %v1902 = vadd.f32 %v954, %v1901
    %1903 = vmatprep.mubr.bf16.mxu0 %v928
    %1904 = vmatmul.mubr.bf16.gmra.mxu0 %v927
    %v1905 = vpop.f32.mrf.mxu0
    %v1906 = vadd.f32 %v950, %v1905
    %v1907 = vpop.f32.mrf.mxu0
    %v1908 = vadd.f32 %v954, %v1907
    %v1909 = vpop.f32.mrf.mxu0
    %v1910 = vadd.f32 %v950, %v1909
    %v1911 = vpop.f32.mrf.mxu0
    %v1912 = vadd.f32 %v954, %v1911
    %1913 = vmatprep.mubr.bf16.mxu0 %v932
    %1914 = vmatmul.mubr.bf16.gmra.mxu0 %v931
    %v1915 = vpop.f32.mrf.mxu0
    %v1916 = vadd.f32 %v950, %v1915
    %v1917 = vpop.f32.mrf.mxu0
    %v1918 = vadd.f32 %v954, %v1917
    %v1919 = vpop.f32.mrf.mxu0
    %v1920 = vadd.f32 %v950, %v1919
    %v1921 = vpop.f32.mrf.mxu0
    %v1922 = vadd.f32 %v954, %v1921
    %1923 = vmatprep.mubr.bf16.mxu0 %v936
    %1924 = vmatmul.mubr.bf16.gmra.mxu0 %v935
    %v1925 = vpop.f32.mrf.mxu0
    %v1926 = vadd.f32 %v950, %v1925
    %v1927 = vpop.f32.mrf.mxu0
    %v1928 = vadd.f32 %v954, %v1927
    %v1929 = vpop.f32.mrf.mxu0
    %v1930 = vadd.f32 %v950, %v1929
    %v1931 = vpop.f32.mrf.mxu0
    %v1932 = vadd.f32 %v954, %v1931
    %1933 = vdwg.mxu0
    %1934 = vmatprep.subr.bf16.mxu0 %v1434
    %1935 = vmatpush1.bf16.msra.mxu0 %v1433
    %1936 = vmatprep.subr.bf16.mxu0 %v1430
    %1937 = vmatpush1.bf16.msra.mxu0 %v1429
    %1938 = vmatprep.subr.bf16.mxu0 %v1426
    %1939 = vmatpush1.bf16.msra.mxu0 %v1425
    %1940 = vmatprep.subr.bf16.mxu0 %v1422
    %1941 = vmatpush1.bf16.msra.mxu0 %v1421
    %1942 = vmatprep.subr.bf16.mxu0 %v1418
    %1943 = vmatpush1.bf16.msra.mxu0 %v1417
    %1944 = vmatprep.subr.bf16.mxu0 %v1414
    %1945 = vmatpush1.bf16.msra.mxu0 %v1413
    %1946 = vmatprep.subr.bf16.mxu0 %v1410
    %1947 = vmatpush1.bf16.msra.mxu0 %v1409
    %1948 = vmatprep.subr.bf16.mxu0 %v1406
    %1949 = vmatpush1.bf16.msra.mxu0 %v1405
    %1950 = vmatprep.subr.bf16.mxu0 %v1466
    %1951 = vmatpush2.bf16.msra.mxu0 %v1465
    %1952 = vmatprep.subr.bf16.mxu0 %v1462
    %1953 = vmatpush2.bf16.msra.mxu0 %v1461
    %1954 = vmatprep.subr.bf16.mxu0 %v1458
    %1955 = vmatpush2.bf16.msra.mxu0 %v1457
    %1956 = vmatprep.subr.bf16.mxu0 %v1454
    %1957 = vmatpush2.bf16.msra.mxu0 %v1453
    %1958 = vmatprep.subr.bf16.mxu0 %v1450
    %1959 = vmatpush2.bf16.msra.mxu0 %v1449
    %1960 = vmatprep.subr.bf16.mxu0 %v1446
    %1961 = vmatpush2.bf16.msra.mxu0 %v1445
    %1962 = vmatprep.subr.bf16.mxu0 %v1442
    %1963 = vmatpush2.bf16.msra.mxu0 %v1441
    %1964 = vmatprep.subr.bf16.mxu0 %v1438
    %1965 = vmatpush2.bf16.msra.mxu0 %v1437
    %1966 = vmatprep.mubr.bf16.mxu0 %v910
    %1967 = vmatmul.mubr.bf16.gmra.mxu0 %v909
    %v1968 = vpop.f32.mrf.mxu0
    %v1969 = vadd.f32 %v1856, %v1968
    %v1970 = vpop.f32.mrf.mxu0
    %v1971 = vadd.f32 %v1858, %v1970
    %v1972 = vpop.f32.mrf.mxu0
    %v1973 = vadd.f32 %v1860, %v1972
    %v1974 = vpop.f32.mrf.mxu0
    %v1975 = vadd.f32 %v1862, %v1974
    %1976 = vmatprep.mubr.bf16.mxu0 %v914
    %1977 = vmatmul.mubr.bf16.gmra.mxu0 %v913
    %v1978 = vpop.f32.mrf.mxu0
    %v1979 = vadd.f32 %v1866, %v1978
    %v1980 = vpop.f32.mrf.mxu0
    %v1981 = vadd.f32 %v1868, %v1980
    %v1982 = vpop.f32.mrf.mxu0
    %v1983 = vadd.f32 %v1870, %v1982
    %v1984 = vpop.f32.mrf.mxu0
    %v1985 = vadd.f32 %v1872, %v1984
    %1986 = vmatprep.mubr.bf16.mxu0 %v918
    %1987 = vmatmul.mubr.bf16.gmra.mxu0 %v917
    %v1988 = vpop.f32.mrf.mxu0
    %v1989 = vadd.f32 %v1876, %v1988
    %v1990 = vpop.f32.mrf.mxu0
    %v1991 = vadd.f32 %v1878, %v1990
    %v1992 = vpop.f32.mrf.mxu0
    %v1993 = vadd.f32 %v1880, %v1992
    %v1994 = vpop.f32.mrf.mxu0
    %v1995 = vadd.f32 %v1882, %v1994
    %1996 = vmatprep.mubr.bf16.mxu0 %v922
    %1997 = vmatmul.mubr.bf16.gmra.mxu0 %v921
    %v1998 = vpop.f32.mrf.mxu0
    %v1999 = vadd.f32 %v1886, %v1998
    %v2000 = vpop.f32.mrf.mxu0
    %v2001 = vadd.f32 %v1888, %v2000
    %v2002 = vpop.f32.mrf.mxu0
    %v2003 = vadd.f32 %v1890, %v2002
    %v2004 = vpop.f32.mrf.mxu0
    %v2005 = vadd.f32 %v1892, %v2004
    %2006 = vmatprep.mubr.bf16.mxu0 %v926
    %2007 = vmatmul.mubr.bf16.gmra.mxu0 %v925
    %v2008 = vpop.f32.mrf.mxu0
    %v2009 = vadd.f32 %v1896, %v2008
    %v2010 = vpop.f32.mrf.mxu0
    %v2011 = vadd.f32 %v1898, %v2010
    %v2012 = vpop.f32.mrf.mxu0
    %v2013 = vadd.f32 %v1900, %v2012
    %v2014 = vpop.f32.mrf.mxu0
    %v2015 = vadd.f32 %v1902, %v2014
    %2016 = vmatprep.mubr.bf16.mxu0 %v930
    %2017 = vmatmul.mubr.bf16.gmra.mxu0 %v929
    %v2018 = vpop.f32.mrf.mxu0
    %v2019 = vadd.f32 %v1906, %v2018
    %v2020 = vpop.f32.mrf.mxu0
    %v2021 = vadd.f32 %v1908, %v2020
    %v2022 = vpop.f32.mrf.mxu0
    %v2023 = vadd.f32 %v1910, %v2022
    %v2024 = vpop.f32.mrf.mxu0
    %v2025 = vadd.f32 %v1912, %v2024
    %2026 = vmatprep.mubr.bf16.mxu0 %v934
    %2027 = vmatmul.mubr.bf16.gmra.mxu0 %v933
    %v2028 = vpop.f32.mrf.mxu0
    %v2029 = vadd.f32 %v1916, %v2028
    %v2030 = vpop.f32.mrf.mxu0
    %v2031 = vadd.f32 %v1918, %v2030
    %v2032 = vpop.f32.mrf.mxu0
    %v2033 = vadd.f32 %v1920, %v2032
    %v2034 = vpop.f32.mrf.mxu0
    %v2035 = vadd.f32 %v1922, %v2034
    %2036 = vmatprep.mubr.bf16.mxu0 %v938
    %2037 = vmatmul.mubr.bf16.gmra.mxu0 %v937
    %v2038 = vpop.f32.mrf.mxu0
    %v2039 = vadd.f32 %v1926, %v2038
    %v2040 = vpop.f32.mrf.mxu0
    %v2041 = vadd.f32 %v1928, %v2040
    %v2042 = vpop.f32.mrf.mxu0
    %v2043 = vadd.f32 %v1930, %v2042
    %v2044 = vpop.f32.mrf.mxu0
    %v2045 = vadd.f32 %v1932, %v2044
    %2046 = vdwg.mxu0
    %v2047 = vmax.f32 %v1743, 0.0
    %v2048 = vmax.f32 %v1745, 0.0
    %v2049 = vmax.f32 %v1969, 0.0
    %v2050 = vmax.f32 %v1971, 0.0
    %v2051 = vmax.f32 %v1747, 0.0
    %v2052 = vmax.f32 %v1749, 0.0
    %v2053 = vmax.f32 %v1973, 0.0
    %v2054 = vmax.f32 %v1975, 0.0
    %v2055 = vmax.f32 %v1753, 0.0
    %v2056 = vmax.f32 %v1755, 0.0
    %v2057 = vmax.f32 %v1979, 0.0
    %v2058 = vmax.f32 %v1981, 0.0
    %v2059 = vmax.f32 %v1757, 0.0
    %v2060 = vmax.f32 %v1759, 0.0
    %v2061 = vmax.f32 %v1983, 0.0
    %v2062 = vmax.f32 %v1985, 0.0
    %v2063 = vmax.f32 %v1763, 0.0
    %v2064 = vmax.f32 %v1765, 0.0
    %v2065 = vmax.f32 %v1989, 0.0
    %v2066 = vmax.f32 %v1991, 0.0
    %v2067 = vmax.f32 %v1767, 0.0
    %v2068 = vmax.f32 %v1769, 0.0
    %v2069 = vmax.f32 %v1993, 0.0
    %v2070 = vmax.f32 %v1995, 0.0
    %v2071 = vmax.f32 %v1773, 0.0
    %v2072 = vmax.f32 %v1775, 0.0
    %v2073 = vmax.f32 %v1999, 0.0
    %v2074 = vmax.f32 %v2001, 0.0
    %v2075 = vmax.f32 %v1777, 0.0
    %v2076 = vmax.f32 %v1779, 0.0
    %v2077 = vmax.f32 %v2003, 0.0
    %v2078 = vmax.f32 %v2005, 0.0
    %v2079 = vmax.f32 %v1783, 0.0
    %v2080 = vmax.f32 %v1785, 0.0
    %v2081 = vmax.f32 %v2009, 0.0
    %v2082 = vmax.f32 %v2011, 0.0
    %v2083 = vmax.f32 %v1787, 0.0
    %v2084 = vmax.f32 %v1789, 0.0
    %v2085 = vmax.f32 %v2013, 0.0
    %v2086 = vmax.f32 %v2015, 0.0
    %v2087 = vmax.f32 %v1793, 0.0
    %v2088 = vmax.f32 %v1795, 0.0
    %v2089 = vmax.f32 %v2019, 0.0
    %v2090 = vmax.f32 %v2021, 0.0
    %v2091 = vmax.f32 %v1797, 0.0
    %v2092 = vmax.f32 %v1799, 0.0
    %v2093 = vmax.f32 %v2023, 0.0
    %v2094 = vmax.f32 %v2025, 0.0
    %v2095 = vmax.f32 %v1803, 0.0
    %v2096 = vmax.f32 %v1805, 0.0
    %v2097 = vmax.f32 %v2029, 0.0
    %v2098 = vmax.f32 %v2031, 0.0
    %v2099 = vmax.f32 %v1807, 0.0
    %v2100 = vmax.f32 %v1809, 0.0
    %v2101 = vmax.f32 %v2033, 0.0
    %v2102 = vmax.f32 %v2035, 0.0
    %v2103 = vmax.f32 %v1813, 0.0
    %v2104 = vmax.f32 %v1815, 0.0
    %v2105 = vmax.f32 %v2039, 0.0
    %v2106 = vmax.f32 %v2041, 0.0
    %v2107 = vmax.f32 %v1817, 0.0
    %v2108 = vmax.f32 %v1819, 0.0
    %v2109 = vmax.f32 %v2043, 0.0
    %v2110 = vmax.f32 %v2045, 0.0
    %v2111 = vld [vmem:[#allocation2 + $0x400] sm:$0x8]
    %v2112 = vunpack.c.l.bf16 %v2111
    %v2113 = vlaneseq
    %v2114 = vshrl.u32 %v2113, 7
    %v2115 = vsub.s32 5, %v2114
    %v2116 = vrot.slane %v903, %v2115
    %v2117 = vlaneseq
    %v2118 = vshrl.u32 %v2117, 7
    %v2119 = vsub.s32 5, %v2118
    %v2120 = vrot.slane %v904, %v2119
    %v2121 = vlaneseq
    %v2122 = vshrl.u32 %v2121, 7
    %v2123 = vsub.s32 5, %v2122
    %v2124 = vrot.slane %v905, %v2123
    %v2125 = vlaneseq
    %v2126 = vshrl.u32 %v2125, 7
    %v2127 = vsub.s32 5, %v2126
    %v2128 = vrot.slane %v906, %v2127
    %v2129 = vmul.f32 %v2047, %v2116
    %v2130 = vmul.f32 %v2048, %v2120
    %v2131 = vmul.f32 %v2049, %v2124
    %v2132 = vmul.f32 %v2050, %v2128
    %v2133 = vmul.f32 %v2051, %v2116
    %v2134 = vmul.f32 %v2052, %v2120
    %v2135 = vmul.f32 %v2053, %v2124
    %v2136 = vmul.f32 %v2054, %v2128
    %v2137 = vmul.f32 %v2055, %v2116
    %v2138 = vmul.f32 %v2056, %v2120
    %v2139 = vmul.f32 %v2057, %v2124
    %v2140 = vmul.f32 %v2058, %v2128
    %v2141 = vmul.f32 %v2059, %v2116
    %v2142 = vmul.f32 %v2060, %v2120
    %v2143 = vmul.f32 %v2061, %v2124
    %v2144 = vmul.f32 %v2062, %v2128
    %v2145 = vmul.f32 %v2063, %v2116
    %v2146 = vmul.f32 %v2064, %v2120
    %v2147 = vmul.f32 %v2065, %v2124
    %v2148 = vmul.f32 %v2066, %v2128
    %v2149 = vmul.f32 %v2067, %v2116
    %v2150 = vmul.f32 %v2068, %v2120
    %v2151 = vmul.f32 %v2069, %v2124
    %v2152 = vmul.f32 %v2070, %v2128
    %v2153 = vmul.f32 %v2071, %v2116
    %v2154 = vmul.f32 %v2072, %v2120
    %v2155 = vmul.f32 %v2073, %v2124
    %v2156 = vmul.f32 %v2074, %v2128
    %v2157 = vmul.f32 %v2075, %v2116
    %v2158 = vmul.f32 %v2076, %v2120
    %v2159 = vmul.f32 %v2077, %v2124
    %v2160 = vmul.f32 %v2078, %v2128
    %v2161 = vmul.f32 %v2079, %v2116
    %v2162 = vmul.f32 %v2080, %v2120
    %v2163 = vmul.f32 %v2081, %v2124
    %v2164 = vmul.f32 %v2082, %v2128
    %v2165 = vmul.f32 %v2083, %v2116
    %v2166 = vmul.f32 %v2084, %v2120
    %v2167 = vmul.f32 %v2085, %v2124
    %v2168 = vmul.f32 %v2086, %v2128
    %v2169 = vmul.f32 %v2087, %v2116
    %v2170 = vmul.f32 %v2088, %v2120
    %v2171 = vmul.f32 %v2089, %v2124
    %v2172 = vmul.f32 %v2090, %v2128
    %v2173 = vmul.f32 %v2091, %v2116
    %v2174 = vmul.f32 %v2092, %v2120
    %v2175 = vmul.f32 %v2093, %v2124
    %v2176 = vmul.f32 %v2094, %v2128
    %v2177 = vmul.f32 %v2095, %v2116
    %v2178 = vmul.f32 %v2096, %v2120
    %v2179 = vmul.f32 %v2097, %v2124
    %v2180 = vmul.f32 %v2098, %v2128
    %v2181 = vmul.f32 %v2099, %v2116
    %v2182 = vmul.f32 %v2100, %v2120
    %v2183 = vmul.f32 %v2101, %v2124
    %v2184 = vmul.f32 %v2102, %v2128
    %v2185 = vmul.f32 %v2103, %v2116
    %v2186 = vmul.f32 %v2104, %v2120
    %v2187 = vmul.f32 %v2105, %v2124
    %v2188 = vmul.f32 %v2106, %v2128
    %v2189 = vmul.f32 %v2107, %v2116
    %v2190 = vmul.f32 %v2108, %v2120
    %v2191 = vmul.f32 %v2109, %v2124
    %v2192 = vmul.f32 %v2110, %v2128
    %v2193 = vadd.f32 %v2129, %v2130
    %v2194 = vadd.f32 %v2193, %v2131
    %v2195 = vadd.f32 %v2194, %v2132
    %2196 = vadd.xlane.f32.xlu0 %v2195
    %v2197 = vpop.xlane.xlu0 %2196
    %v2198 = vadd.f32 %v2133, %v2134
    %v2199 = vadd.f32 %v2198, %v2135
    %v2200 = vadd.f32 %v2199, %v2136
    %2201 = vadd.xlane.f32.xlu0 %v2200
    %v2202 = vpop.xlane.xlu0 %2201
    %v2203 = vadd.f32 %v2137, %v2138
    %v2204 = vadd.f32 %v2203, %v2139
    %v2205 = vadd.f32 %v2204, %v2140
    %2206 = vadd.xlane.f32.xlu0 %v2205
    %v2207 = vpop.xlane.xlu0 %2206
    %v2208 = vadd.f32 %v2141, %v2142
    %v2209 = vadd.f32 %v2208, %v2143
    %v2210 = vadd.f32 %v2209, %v2144
    %2211 = vadd.xlane.f32.xlu0 %v2210
    %v2212 = vpop.xlane.xlu0 %2211
    %v2213 = vadd.f32 %v2145, %v2146
    %v2214 = vadd.f32 %v2213, %v2147
    %v2215 = vadd.f32 %v2214, %v2148
    %2216 = vadd.xlane.f32.xlu0 %v2215
    %v2217 = vpop.xlane.xlu0 %2216
    %v2218 = vadd.f32 %v2149, %v2150
    %v2219 = vadd.f32 %v2218, %v2151
    %v2220 = vadd.f32 %v2219, %v2152
    %2221 = vadd.xlane.f32.xlu0 %v2220
    %v2222 = vpop.xlane.xlu0 %2221
    %v2223 = vadd.f32 %v2153, %v2154
    %v2224 = vadd.f32 %v2223, %v2155
    %v2225 = vadd.f32 %v2224, %v2156
    %2226 = vadd.xlane.f32.xlu0 %v2225
    %v2227 = vpop.xlane.xlu0 %2226
    %v2228 = vadd.f32 %v2157, %v2158
    %v2229 = vadd.f32 %v2228, %v2159
    %v2230 = vadd.f32 %v2229, %v2160
    %2231 = vadd.xlane.f32.xlu0 %v2230
    %v2232 = vpop.xlane.xlu0 %2231
    %v2233 = vadd.f32 %v2161, %v2162
    %v2234 = vadd.f32 %v2233, %v2163
    %v2235 = vadd.f32 %v2234, %v2164
    %2236 = vadd.xlane.f32.xlu0 %v2235
    %v2237 = vpop.xlane.xlu0 %2236
    %v2238 = vadd.f32 %v2165, %v2166
    %v2239 = vadd.f32 %v2238, %v2167
    %v2240 = vadd.f32 %v2239, %v2168
    %2241 = vadd.xlane.f32.xlu0 %v2240
    %v2242 = vpop.xlane.xlu0 %2241
    %v2243 = vadd.f32 %v2169, %v2170
    %v2244 = vadd.f32 %v2243, %v2171
    %v2245 = vadd.f32 %v2244, %v2172
    %2246 = vadd.xlane.f32.xlu0 %v2245
    %v2247 = vpop.xlane.xlu0 %2246
    %v2248 = vadd.f32 %v2173, %v2174
    %v2249 = vadd.f32 %v2248, %v2175
    %v2250 = vadd.f32 %v2249, %v2176
    %2251 = vadd.xlane.f32.xlu0 %v2250
    %v2252 = vpop.xlane.xlu0 %2251
    %v2253 = vadd.f32 %v2177, %v2178
    %v2254 = vadd.f32 %v2253, %v2179
    %v2255 = vadd.f32 %v2254, %v2180
    %2256 = vadd.xlane.f32.xlu0 %v2255
    %v2257 = vpop.xlane.xlu0 %2256
    %v2258 = vadd.f32 %v2181, %v2182
    %v2259 = vadd.f32 %v2258, %v2183
    %v2260 = vadd.f32 %v2259, %v2184
    %2261 = vadd.xlane.f32.xlu0 %v2260
    %v2262 = vpop.xlane.xlu0 %2261
    %v2263 = vadd.f32 %v2185, %v2186
    %v2264 = vadd.f32 %v2263, %v2187
    %v2265 = vadd.f32 %v2264, %v2188
    %2266 = vadd.xlane.f32.xlu0 %v2265
    %v2267 = vpop.xlane.xlu0 %2266
    %v2268 = vadd.f32 %v2189, %v2190
    %v2269 = vadd.f32 %v2268, %v2191
    %v2270 = vadd.f32 %v2269, %v2192
    %2271 = vadd.xlane.f32.xlu0 %v2270
    %v2272 = vpop.xlane.xlu0 %2271
    %v2273 = vlaneseq
    %v2274 = vshrl.u32 %v2273, 7
    %v2275 = vsub.s32 6, %v2274
    %v2276 = vrot.slane %v2112, %v2275
    %v2277 = vadd.f32 %v2197, %v2276
    %v2278 = vadd.f32 %v2202, %v2276
    %v2279 = vadd.f32 %v2207, %v2276
    %v2280 = vadd.f32 %v2212, %v2276
    %v2281 = vadd.f32 %v2217, %v2276
    %v2282 = vadd.f32 %v2222, %v2276
    %v2283 = vadd.f32 %v2227, %v2276
    %v2284 = vadd.f32 %v2232, %v2276
    %v2285 = vadd.f32 %v2237, %v2276
    %v2286 = vadd.f32 %v2242, %v2276
    %v2287 = vadd.f32 %v2247, %v2276
    %v2288 = vadd.f32 %v2252, %v2276
    %v2289 = vadd.f32 %v2257, %v2276
    %v2290 = vadd.f32 %v2262, %v2276
    %v2291 = vadd.f32 %v2267, %v2276
    %v2292 = vadd.f32 %v2272, %v2276
    %v2293 = vtanh.pop %v2277
    %v2294 = vtanh.pop %v2278
    %v2295 = vtanh.pop %v2279
    %v2296 = vtanh.pop %v2280
    %v2297 = vtanh.pop %v2281
    %v2298 = vtanh.pop %v2282
    %v2299 = vtanh.pop %v2283
    %v2300 = vtanh.pop %v2284
    %v2301 = vtanh.pop %v2285
    %v2302 = vtanh.pop %v2286
    %v2303 = vtanh.pop %v2287
    %v2304 = vtanh.pop %v2288
    %v2305 = vtanh.pop %v2289
    %v2306 = vtanh.pop %v2290
    %v2307 = vtanh.pop %v2291
    %v2308 = vtanh.pop %v2292
    %v2309 = vmul.f32 %v2293, 2.0
    %v2310 = vmul.f32 %v2294, 2.0
    %v2311 = vmul.f32 %v2295, 2.0
    %v2312 = vmul.f32 %v2296, 2.0
    %v2313 = vmul.f32 %v2297, 2.0
    %v2314 = vmul.f32 %v2298, 2.0
    %v2315 = vmul.f32 %v2299, 2.0
    %v2316 = vmul.f32 %v2300, 2.0
    %v2317 = vmul.f32 %v2301, 2.0
    %v2318 = vmul.f32 %v2302, 2.0
    %v2319 = vmul.f32 %v2303, 2.0
    %v2320 = vmul.f32 %v2304, 2.0
    %v2321 = vmul.f32 %v2305, 2.0
    %v2322 = vmul.f32 %v2306, 2.0
    %v2323 = vmul.f32 %v2307, 2.0
    %v2324 = vmul.f32 %v2308, 2.0
    %2326 = vset.pattern.permute.xlu0 0
    %2327 = vperm.xlu0 %2326, %v2309
    %v2328 = vpop.permute.xlu0 %2327
    %2331 = vset.pattern.permute.xlu0 0
    %2332 = vperm.xlu0 %2331, %v2310
    %v2333 = vpop.permute.xlu0 %2332
    %2336 = vset.pattern.permute.xlu0 0
    %2337 = vperm.xlu0 %2336, %v2311
    %v2338 = vpop.permute.xlu0 %2337
    %2341 = vset.pattern.permute.xlu0 0
    %2342 = vperm.xlu0 %2341, %v2312
    %v2343 = vpop.permute.xlu0 %2342
    %2346 = vset.pattern.permute.xlu0 0
    %2347 = vperm.xlu0 %2346, %v2313
    %v2348 = vpop.permute.xlu0 %2347
    %2351 = vset.pattern.permute.xlu0 0
    %2352 = vperm.xlu0 %2351, %v2314
    %v2353 = vpop.permute.xlu0 %2352
    %2356 = vset.pattern.permute.xlu0 0
    %2357 = vperm.xlu0 %2356, %v2315
    %v2358 = vpop.permute.xlu0 %2357
    %2361 = vset.pattern.permute.xlu0 0
    %2362 = vperm.xlu0 %2361, %v2316
    %v2363 = vpop.permute.xlu0 %2362
    %2366 = vset.pattern.permute.xlu0 0
    %2367 = vperm.xlu0 %2366, %v2317
    %v2368 = vpop.permute.xlu0 %2367
    %2371 = vset.pattern.permute.xlu0 0
    %2372 = vperm.xlu0 %2371, %v2318
    %v2373 = vpop.permute.xlu0 %2372
    %2376 = vset.pattern.permute.xlu0 0
    %2377 = vperm.xlu0 %2376, %v2319
    %v2378 = vpop.permute.xlu0 %2377
    %2381 = vset.pattern.permute.xlu0 0
    %2382 = vperm.xlu0 %2381, %v2320
    %v2383 = vpop.permute.xlu0 %2382
    %2386 = vset.pattern.permute.xlu0 0
    %2387 = vperm.xlu0 %2386, %v2321
    %v2388 = vpop.permute.xlu0 %2387
    %2391 = vset.pattern.permute.xlu0 0
    %2392 = vperm.xlu0 %2391, %v2322
    %v2393 = vpop.permute.xlu0 %2392
    %2396 = vset.pattern.permute.xlu0 0
    %2397 = vperm.xlu0 %2396, %v2323
    %v2398 = vpop.permute.xlu0 %2397
    %2401 = vset.pattern.permute.xlu0 0
    %2402 = vperm.xlu0 %2401, %v2324
    %v2403 = vpop.permute.xlu0 %2402
    %2405 = vst [vmem:[%s2] sm:$0xff] %v2328
    %2406 = vst [vmem:[%s2 + $0x8] sm:$0xff] %v2333
    %2407 = vst [vmem:[%s2 + $0x10] sm:$0xff] %v2338
    %2408 = vst [vmem:[%s2 + $0x18] sm:$0xff] %v2343
    %2409 = vst [vmem:[%s2 + $0x20] sm:$0xff] %v2348
    %2410 = vst [vmem:[%s2 + $0x28] sm:$0xff] %v2353
    %2411 = vst [vmem:[%s2 + $0x30] sm:$0xff] %v2358
    %2412 = vst [vmem:[%s2 + $0x38] sm:$0xff] %v2363
    %2413 = vst [vmem:[%s2 + $0x40] sm:$0xff] %v2368
    %2414 = vst [vmem:[%s2 + $0x48] sm:$0xff] %v2373
    %2415 = vst [vmem:[%s2 + $0x50] sm:$0xff] %v2378
    %2416 = vst [vmem:[%s2 + $0x58] sm:$0xff] %v2383
    %2417 = vst [vmem:[%s2 + $0x60] sm:$0xff] %v2388
    %2418 = vst [vmem:[%s2 + $0x68] sm:$0xff] %v2393
    %2419 = vst [vmem:[%s2 + $0x70] sm:$0xff] %v2398
    %2420 = vst [vmem:[%s2 + $0x78] sm:$0xff] %v2403
    // Predicated region
    $region14: #{actor_forward.1} parent=1 // pred_check
      _
    $region15: #{actor_forward.1} parent=1 // pred_check_branch
      %2422 = sbr.rel (0) target = $region17
    $region16: #{actor_forward.1} parent=1 // pred_region
      _
    $region17: #{actor_forward.1} parent=1 // pred_fallthru
      _
    // Predicated region
    $region18: #{actor_forward.1} parent=1 // pred_check
      _
    $region19: #{actor_forward.1} parent=1 // pred_check_branch
      %2424 = sbr.rel (0) target = $region21
    $region20: #{actor_forward.1} parent=1 // pred_region
      _
    $region21: #{actor_forward.1} parent=1 // pred_fallthru
      _
    %2425 = vsyncpa [#allocation3], 1

</llo_original>
